<compile_context>
chip_gen: v7x
topology: tpu7x:2x2x1
jax: 0.10.0
libtpu: 0.0.40
codegen_flags: <defaults>
</compile_context>

<pallas_src>
import functools
import math

import numpy as np
import jax
import jax.numpy as jnp
from jax import lax
from jax.experimental import pallas as pl
from jax.experimental.pallas import tpu as pltpu


# -------------------------- VMEM budgeting --------------------------

def _round_up(x, m):
    return ((x + m - 1) // m) * m


def _vmem_limit_bytes():
    """Scoped-VMEM limit: ~3/4 of physical VMEM (128 MiB v5e/v6e, 64 MiB v7x)."""
    cap = 128 * 1024 * 1024
    try:
        info_cap = getattr(pltpu.get_tpu_info(), "vmem_capacity_bytes", None)
        if info_cap:
            cap = int(info_cap)
    except Exception:
        pass
    return (cap * 3) // 4


def _tile_budget_bytes(vmem_limit):
    # Per-tile byte budget for the streamed array.  Input and output tiles are
    # each double-buffered and the kernel keeps a few full-tile f32 temporaries,
    # so stay well below the limit.  Tiles of ~1-4 MiB already sit near the HBM
    # roofline (per-step ~0.35 us overhead amortized); bigger buys little.
    return max(512 * 1024, min(vmem_limit // 24, 4 * 1024 * 1024))


def _choose_row_tile(n_rows, row_bytes, tile_budget):
    """Row tile (multiple of 8) for a (rows, L) layout, sized to tile_budget."""
    aligned_total = _round_up(max(n_rows, 1), 8)
    tr = max(8, (tile_budget // max(row_bytes, 1)) // 8 * 8)
    tr = min(tr, aligned_total)
    # Keep >= 2 grid steps for big arrays so the row axis can be sharded across
    # the two TensorCores on v7x (no effect on v5e/v6e).
    if (tr == aligned_total and aligned_total >= 16
            and aligned_total * row_bytes >= (1 << 20)):
        tr = _round_up((aligned_total + 1) // 2, 8)
    return tr


def _choose_lane_tile(hw, col_bytes, tile_budget):
    """Lane tile (multiple of 128) for a (..., C, HW) layout."""
    aligned_total = _round_up(max(hw, 1), 128)
    t = max(128, (tile_budget // max(col_bytes, 1)) // 128 * 128)
    return min(t, aligned_total)


def _largest_divisor_leq(n, cap):
    cap = max(1, min(n, cap))
    for d in range(cap, 0, -1):
        if n % d == 0:
            return d
    return 1


# -------------------------- kernels --------------------------

def _ln_last_aligned_kernel(x_ref, w_ref, b_ref, o_ref, *, eps):
    # x_ref: (tr, C) with C % 128 == 0; normalize over the lane axis.
    x = x_ref[...].astype(jnp.float32)
    mean = jnp.mean(x, axis=-1, keepdims=True)
    xc = x - mean
    var = jnp.mean(xc * xc, axis=-1, keepdims=True)   # biased, matches F.layer_norm
    inv = lax.rsqrt(var + eps)
    w = w_ref[...].astype(jnp.float32)
    b = b_ref[...].astype(jnp.float32)
    o_ref[...] = (xc * inv * w + b).astype(o_ref.dtype)


def _ln_last_folded_kernel(x_ref, w_ref, b_ref, s_ref, st_ref, o_ref, *, c, eps):
    # x_ref: (tr, L) with L = k*C a multiple of 128; each row holds k independent
    # length-C segments.  s_ref: (L, k) 0/1 segment matrix, st_ref = s_ref.T.
    # Segment statistics go through the MXU so every load/store is lane-dense.
    x = x_ref[...].astype(jnp.float32)
    s = s_ref[...]
    st = st_ref[...]
    inv_c = 1.0 / c
    hi = lax.Precision.HIGHEST                         # exact f32 MXU passes
    sum_x = jnp.dot(x, s, preferred_element_type=jnp.float32, precision=hi)
    mean = jnp.dot(sum_x * inv_c, st, preferred_element_type=jnp.float32,
                   precision=hi)                       # (tr, L)
    xc = x - mean
    sum_xc2 = jnp.dot(xc * xc, s, preferred_element_type=jnp.float32, precision=hi)
    inv = lax.rsqrt(sum_xc2 * inv_c + eps)             # (tr, k)
    inv_full = jnp.dot(inv, st, preferred_element_type=jnp.float32, precision=hi)
    w = w_ref[...].astype(jnp.float32)
    b = b_ref[...].astype(jnp.float32)
    o_ref[...] = (xc * inv_full * w + b).astype(o_ref.dtype)


def _ln_first_kernel(x_ref, w_ref, b_ref, o_ref, *, eps):
    # x_ref: (nb, C, t), w_ref/b_ref: (C, 1) — normalize over axis 1 (sublanes).
    x = x_ref[...].astype(jnp.float32)
    mean = jnp.mean(x, axis=1, keepdims=True)
    xc = x - mean
    var = jnp.mean(xc * xc, axis=1, keepdims=True)     # biased, matches .pow(2).mean(1)
    inv = lax.rsqrt(var + eps)
    w = w_ref[...].astype(jnp.float32)[None, :, :]     # (1, C, 1)
    b = b_ref[...].astype(jnp.float32)[None, :, :]
    o_ref[...] = (xc * inv * w + b).astype(o_ref.dtype)


# -------------------------- wrapper --------------------------

def layer_norm(x, weight, bias, eps=1e-6, data_format="channels_last"):
    vmem_limit = _vmem_limit_bytes()
    tile_budget = _tile_budget_bytes(vmem_limit)
    itemsize = jnp.dtype(x.dtype).itemsize

    if data_format == "channels_last":
        orig_shape = x.shape
        C = orig_shape[-1]
        rows = int(np.prod(orig_shape[:-1]))
        x2 = x.reshape(rows, C)

        k = 128 // math.gcd(C, 128)        # fold factor: k*C is a multiple of 128
        L = k * C
        R2 = pl.cdiv(rows, k)              # number of folded "super rows"
        tr = _choose_row_tile(R2, L * itemsize, tile_budget)
        grid0 = pl.cdiv(R2, tr)
        R2p = grid0 * tr
        rows_p = R2p * k
        if rows_p != rows:                 # pad instead of full-array fallback
            x2 = jnp.pad(x2, ((0, rows_p - rows), (0, 0)))
        xf = x2.reshape(R2p, L)

        cparams = pltpu.CompilerParams(
            dimension_semantics=("parallel",),
            vmem_limit_bytes=int(vmem_limit))

        if k == 1:
            # C already a multiple of 128: plain lane reduction.
            out = pl.pallas_call(
                functools.partial(_ln_last_aligned_kernel, eps=eps),
                out_shape=jax.ShapeDtypeStruct((R2p, L), x.dtype),
                grid_spec=pltpu.PrefetchScalarGridSpec(
                    num_scalar_prefetch=0,
                    grid=(grid0,),
                    in_specs=[
                        pl.BlockSpec((tr, L), lambda i: (i, 0)),
                        pl.BlockSpec((1, L), lambda i: (0, 0)),
                        pl.BlockSpec((1, L), lambda i: (0, 0)),
                    ],
                    out_specs=pl.BlockSpec((tr, L), lambda i: (i, 0)),
                ),
                compiler_params=cparams,
            )(xf, weight.reshape(1, C), bias.reshape(1, C))
        else:
            # Small / unaligned C: k rows folded into the lanes; segmented
            # reduction via a constant 0/1 segment matrix (and its transpose).
            seg = (np.arange(L)[:, None] // C == np.arange(k)[None, :])
            s_mat = jnp.asarray(seg.astype(np.float32))        # (L, k)
            st_mat = jnp.asarray(seg.T.astype(np.float32))     # (k, L)
            w_full = jnp.tile(weight.reshape(-1), k).reshape(1, L)
            b_full = jnp.tile(bias.reshape(-1), k).reshape(1, L)
            out = pl.pallas_call(
                functools.partial(_ln_last_folded_kernel, c=C, eps=eps),
                out_shape=jax.ShapeDtypeStruct((R2p, L), x.dtype),
                grid_spec=pltpu.PrefetchScalarGridSpec(
                    num_scalar_prefetch=0,
                    grid=(grid0,),
                    in_specs=[
                        pl.BlockSpec((tr, L), lambda i: (i, 0)),
                        pl.BlockSpec((1, L), lambda i: (0, 0)),
                        pl.BlockSpec((1, L), lambda i: (0, 0)),
                        pl.BlockSpec((L, k), lambda i: (0, 0)),
                        pl.BlockSpec((k, L), lambda i: (0, 0)),
                    ],
                    out_specs=pl.BlockSpec((tr, L), lambda i: (i, 0)),
                ),
                compiler_params=cparams,
            )(xf, w_full, b_full, s_mat, st_mat)

        out = out.reshape(rows_p, C)
        if rows_p != rows:
            out = out[:rows]
        return out.reshape(orig_shape)

    elif data_format == "channels_first":
        N, C, H, W = x.shape
        HW = H * W
        x3 = x.reshape(N, C, HW)

        t = _choose_lane_tile(HW, C * itemsize, tile_budget)
        grid_j = pl.cdiv(HW, t)
        HWp = grid_j * t
        if HWp != HW:                      # pad lanes instead of full-array fallback
            x3 = jnp.pad(x3, ((0, 0), (0, 0), (0, HWp - HW)))
        nb = _largest_divisor_leq(N, max(1, tile_budget // max(1, C * t * itemsize)))
        grid_n = N // nb

        out = pl.pallas_call(
            functools.partial(_ln_first_kernel, eps=eps),
            out_shape=jax.ShapeDtypeStruct((N, C, HWp), x.dtype),
            grid_spec=pltpu.PrefetchScalarGridSpec(
                num_scalar_prefetch=0,
                grid=(grid_n, grid_j),
                in_specs=[
                    pl.BlockSpec((nb, C, t), lambda n, j: (n, 0, j)),
                    pl.BlockSpec((C, 1), lambda n, j: (0, 0)),
                    pl.BlockSpec((C, 1), lambda n, j: (0, 0)),
                ],
                out_specs=pl.BlockSpec((nb, C, t), lambda n, j: (n, 0, j)),
            ),
            compiler_params=pltpu.CompilerParams(
                dimension_semantics=("parallel", "parallel"),
                vmem_limit_bytes=int(vmem_limit)),
        )(x3, weight.reshape(C, 1), bias.reshape(C, 1))
        if HWp != HW:
            out = out[..., :HW]
        return out.reshape(N, C, H, W)

    raise NotImplementedError(data_format)


# -------------------------- pure-JAX references --------------------------

def _ref_last(x, w, b, eps):
    m = x.mean(-1, keepdims=True)
    v = ((x - m) ** 2).mean(-1, keepdims=True)
    return (x - m) / jnp.sqrt(v + eps) * w + b


def _ref_first(x, w, b, eps):
    m = x.mean(1, keepdims=True)
    v = ((x - m) ** 2).mean(1, keepdims=True)
    return (x - m) / jnp.sqrt(v + eps) * w[None, :, None, None] + b[None, :, None, None]


# -------------------------- main --------------------------

if __name__ == "__main__":
    key = jax.random.PRNGKey(0)
    ks = jax.random.split(key, 10)
    eps = 1e-6

    # channels_last, C=32 (< 128) -> folded lane-dense path
    C_last = 32
    x_last = jax.random.normal(ks[0], (2, 8, 8, C_last), dtype=jnp.float32)
    w_last = 1.0 + 0.1 * jax.random.normal(ks[1], (C_last,), dtype=jnp.float32)
    b_last = 0.1 * jax.random.normal(ks[2], (C_last,), dtype=jnp.float32)
    y_last = layer_norm(x_last, w_last, b_last, eps=eps, data_format="channels_last")

    # channels_last, C=128 -> aligned lane-reduction path
    C_big = 128
    x_big = jax.random.normal(ks[3], (2, 4, 4, C_big), dtype=jnp.float32)
    w_big = 1.0 + 0.1 * jax.random.normal(ks[4], (C_big,), dtype=jnp.float32)
    b_big = 0.1 * jax.random.normal(ks[5], (C_big,), dtype=jnp.float32)
    y_big = layer_norm(x_big, w_big, b_big, eps=eps, data_format="channels_last")

    # channels_first, C=4
    C_first = 4
    x_first = jax.random.normal(ks[6], (2, C_first, 16, 16), dtype=jnp.float32)
    w_first = 1.0 + 0.1 * jax.random.normal(ks[7], (C_first,), dtype=jnp.float32)
    b_first = 0.1 * jax.random.normal(ks[8], (C_first,), dtype=jnp.float32)
    y_first = layer_norm(x_first, w_first, b_first, eps=eps, data_format="channels_first")

    # odd shapes exercise the padding paths (rows % 8 != 0, HW % 128 != 0)
    x_odd_last = jax.random.normal(ks[9], (2, 7, 9, C_last), dtype=jnp.float32)
    y_odd_last = layer_norm(x_odd_last, w_last, b_last, eps=eps,
                            data_format="channels_last")
    x_odd_first = jax.random.normal(ks[9], (2, C_first, 10, 10), dtype=jnp.float32)
    y_odd_first = layer_norm(x_odd_first, w_first, b_first, eps=eps,
                             data_format="channels_first")

    jax.block_until_ready((y_last, y_big, y_first, y_odd_last, y_odd_first))

    np.testing.assert_allclose(
        np.asarray(y_last), np.asarray(_ref_last(x_last, w_last, b_last, eps)),
        atol=1e-5, rtol=1e-5)
    np.testing.assert_allclose(
        np.asarray(y_big), np.asarray(_ref_last(x_big, w_big, b_big, eps)),
        atol=1e-5, rtol=1e-5)
    np.testing.assert_allclose(
        np.asarray(y_first), np.asarray(_ref_first(x_first, w_first, b_first, eps)),
        atol=1e-5, rtol=1e-5)
    np.testing.assert_allclose(
        np.asarray(y_odd_last), np.asarray(_ref_last(x_odd_last, w_last, b_last, eps)),
        atol=1e-5, rtol=1e-5)
    np.testing.assert_allclose(
        np.asarray(y_odd_first), np.asarray(_ref_first(x_odd_first, w_first, b_first, eps)),
        atol=1e-5, rtol=1e-5)

    print("KERNEL_OK")
</pallas_src>

<mosaic_0001>
module attributes {stable_mosaic.version = 11 : i64} {
  func.func @_ln_last_folded_kernel(%arg0: i32, %arg1: memref<32x128xf32, #tpu.memory_space<vmem>>, %arg2: memref<1x128xf32, #tpu.memory_space<vmem>>, %arg3: memref<1x128xf32, #tpu.memory_space<vmem>>, %arg4: memref<128x4xf32, #tpu.memory_space<vmem>>, %arg5: memref<4x128xf32, #tpu.memory_space<vmem>>, %arg6: memref<32x128xf32, #tpu.memory_space<vmem>>) attributes {dimension_semantics = [#tpu.dimension_semantics<parallel>], iteration_bounds = array<i64: 1>, scalar_prefetch = 0 : i64, scratch_operands = 0 : i64, tpu.core_type = #tpu.core_type<tc>, window_params = [{transform_indices = @transform_0, window_bounds = array<i64: 32, 128>}, {pipeline_mode = #tpu.pipeline_mode<synchronous>, transform_indices = @transform_1, window_bounds = array<i64: 1, 128>}, {pipeline_mode = #tpu.pipeline_mode<synchronous>, transform_indices = @transform_2, window_bounds = array<i64: 1, 128>}, {pipeline_mode = #tpu.pipeline_mode<synchronous>, transform_indices = @transform_3, window_bounds = array<i64: 128, 4>}, {pipeline_mode = #tpu.pipeline_mode<synchronous>, transform_indices = @transform_4, window_bounds = array<i64: 4, 128>}, {transform_indices = @transform_5, window_bounds = array<i64: 32, 128>}]} {
    %c0 = arith.constant 0 : index
    %c0_0 = arith.constant 0 : index
    %0 = vector.load %arg1[%c0, %c0_0] : memref<32x128xf32, #tpu.memory_space<vmem>>, vector<32x128xf32>
    %c0_1 = arith.constant 0 : index
    %c0_2 = arith.constant 0 : index
    %1 = vector.load %arg4[%c0_1, %c0_2] : memref<128x4xf32, #tpu.memory_space<vmem>>, vector<128x4xf32>
    %c0_3 = arith.constant 0 : index
    %c0_4 = arith.constant 0 : index
    %2 = vector.load %arg5[%c0_3, %c0_4] : memref<4x128xf32, #tpu.memory_space<vmem>>, vector<4x128xf32>
    %cst = arith.constant dense<0.000000e+00> : vector<32x4xf32>
    %3 = tpu.matmul %0, %1, %cst {dimension_numbers = #tpu.dot_dimension_numbers<[1], [0], [0], [1], [0, 0, 1, 1], [], []>, precision = #tpu.contract_precision<fp32>} : vector<32x128xf32>, vector<128x4xf32>, vector<32x4xf32> -> vector<32x4xf32>
    %cst_5 = arith.constant 3.125000e-02 : f32
    %4 = vector.broadcast %cst_5 : f32 to vector<32x4xf32>
    %5 = arith.mulf %3, %4 : vector<32x4xf32>
    %cst_6 = arith.constant dense<0.000000e+00> : vector<32x128xf32>
    %6 = tpu.matmul %5, %2, %cst_6 {dimension_numbers = #tpu.dot_dimension_numbers<[1], [0], [0], [1], [0, 0, 1, 1], [], []>, precision = #tpu.contract_precision<fp32>} : vector<32x4xf32>, vector<4x128xf32>, vector<32x128xf32> -> vector<32x128xf32>
    %7 = arith.subf %0, %6 : vector<32x128xf32>
    %8 = arith.mulf %7, %7 : vector<32x128xf32>
    %cst_7 = arith.constant dense<0.000000e+00> : vector<32x4xf32>
    %9 = tpu.matmul %8, %1, %cst_7 {dimension_numbers = #tpu.dot_dimension_numbers<[1], [0], [0], [1], [0, 0, 1, 1], [], []>, precision = #tpu.contract_precision<fp32>} : vector<32x128xf32>, vector<128x4xf32>, vector<32x4xf32> -> vector<32x4xf32>
    %cst_8 = arith.constant 3.125000e-02 : f32
    %10 = vector.broadcast %cst_8 : f32 to vector<32x4xf32>
    %11 = arith.mulf %9, %10 : vector<32x4xf32>
    %cst_9 = arith.constant 9.99999997E-7 : f32
    %12 = vector.broadcast %cst_9 : f32 to vector<32x4xf32>
    %13 = arith.addf %11, %12 : vector<32x4xf32>
    %14 = math.rsqrt %13 : vector<32x4xf32>
    %cst_10 = arith.constant dense<0.000000e+00> : vector<32x128xf32>
    %15 = tpu.matmul %14, %2, %cst_10 {dimension_numbers = #tpu.dot_dimension_numbers<[1], [0], [0], [1], [0, 0, 1, 1], [], []>, precision = #tpu.contract_precision<fp32>} : vector<32x4xf32>, vector<4x128xf32>, vector<32x128xf32> -> vector<32x128xf32>
    %c0_11 = arith.constant 0 : index
    %c0_12 = arith.constant 0 : index
    %16 = vector.load %arg2[%c0_11, %c0_12] : memref<1x128xf32, #tpu.memory_space<vmem>>, vector<1x128xf32>
    %c0_13 = arith.constant 0 : index
    %c0_14 = arith.constant 0 : index
    %17 = vector.load %arg3[%c0_13, %c0_14] : memref<1x128xf32, #tpu.memory_space<vmem>>, vector<1x128xf32>
    %18 = arith.mulf %7, %15 : vector<32x128xf32>
    %19 = vector.broadcast %16 : vector<1x128xf32> to vector<32x128xf32>
    %20 = arith.mulf %18, %19 : vector<32x128xf32>
    %21 = vector.broadcast %17 : vector<1x128xf32> to vector<32x128xf32>
    %22 = arith.addf %20, %21 : vector<32x128xf32>
    %c0_15 = arith.constant 0 : index
    %c0_16 = arith.constant 0 : index
    %23 = vector.load %arg6[%c0_15, %c0_16] : memref<32x128xf32, #tpu.memory_space<vmem>>, vector<32x128xf32>
    tpu.vector_store %arg6[%c0_15, %c0_16], %22 {strides = array<i32>} : memref<32x128xf32, #tpu.memory_space<vmem>>, vector<32x128xf32>,
    return
  }
  func.func @transform_0(%arg0: i32) -> (i32, i32) {
    %c0_i32 = arith.constant 0 : i32
    %c0_i32_0 = arith.constant 0 : i32
    return %arg0, %c0_i32 : i32, i32
  }
  func.func @transform_1(%arg0: i32) -> (i32, i32) {
    %c0_i32 = arith.constant 0 : i32
    %c0_i32_0 = arith.constant 0 : i32
    %c0_i32_1 = arith.constant 0 : i32
    return %c0_i32, %c0_i32_0 : i32, i32
  }
  func.func @transform_2(%arg0: i32) -> (i32, i32) {
    %c0_i32 = arith.constant 0 : i32
    %c0_i32_0 = arith.constant 0 : i32
    %c0_i32_1 = arith.constant 0 : i32
    return %c0_i32, %c0_i32_0 : i32, i32
  }
  func.func @transform_3(%arg0: i32) -> (i32, i32) {
    %c0_i32 = arith.constant 0 : i32
    %c0_i32_0 = arith.constant 0 : i32
    %c0_i32_1 = arith.constant 0 : i32
    return %c0_i32, %c0_i32_0 : i32, i32
  }
  func.func @transform_4(%arg0: i32) -> (i32, i32) {
    %c0_i32 = arith.constant 0 : i32
    %c0_i32_0 = arith.constant 0 : i32
    %c0_i32_1 = arith.constant 0 : i32
    return %c0_i32, %c0_i32_0 : i32, i32
  }
  func.func @transform_5(%arg0: i32) -> (i32, i32) {
    %c0_i32 = arith.constant 0 : i32
    %c0_i32_0 = arith.constant 0 : i32
    return %arg0, %c0_i32 : i32, i32
  }
}

</mosaic_0001>

<llo_original>
// kernel: tpu_custom_call.1
$region0: #{tpu_custom_call.1}
  #allocation0 [shape = 'u32[]', space=smem, size = 0x4, offset = 0x4, fixed_abs, tag = 'smem constant byte address 0x4 - core index']
  #allocation1 [shape = 'u32[144,128]{1,0:T(1,128)}', space=vmem, size = 0x12000, scoped, tag = 'internal scratch']
  %s0 = inlined_call_operand.hbm [shape: f32[32,128], index: 0, kind: input, shape index: {}]
  %s1 = inlined_call_operand.hbm [shape: f32[1,128], index: 1, kind: input, shape index: {}]
  %s2 = inlined_call_operand.hbm [shape: f32[1,128], index: 2, kind: input, shape index: {}]
  %s3 = inlined_call_operand.hbm [shape: f32[128,4], index: 3, kind: input, shape index: {}]
  %s4 = inlined_call_operand.hbm [shape: f32[4,128], index: 4, kind: input, shape index: {}]
  %s5 = inlined_call_operand.hbm [shape: f32[32,128], index: 5, kind: output, shape index: {}]
  %s6 = sld [smem:[#allocation0]]
  $region50: #{tpu_custom_call.1} parent=0
    _
  %s8 = ssub.s32 1, %s6
  %s9 = scalar_select 0, %s8, %s6
  $region1: #{tpu_custom_call.1} parent=0
    #allocation2 [shape = 'u8[16384]{0}', space=vmem, size = 0x4000, scoped, tag = 'input window, operand 0, single buffered']
    #allocation3 [shape = 's32[1]{0}', space=sflag, size = 0x4, scoped, tag = 'scoped memory for tpu_custom_call.1']
    #allocation4 [shape = 's32[1]{0}', space=sflag, size = 0x4, scoped, tag = 'scoped memory for tpu_custom_call.1']
    #allocation5 [shape = 'u8[512]{0}', space=vmem, size = 0x400, scoped, tag = 'input window, operand 1, single buffered']
    #allocation6 [shape = 's32[1]{0}', space=sflag, size = 0x4, scoped, tag = 'scoped memory for tpu_custom_call.1']
    #allocation7 [shape = 'u8[512]{0}', space=vmem, size = 0x400, scoped, tag = 'input window, operand 2, single buffered']
    #allocation8 [shape = 'u8[65536]{0}', space=vmem, size = 0x10000, scoped, tag = 'input window, operand 3, single buffered']
    #allocation9 [shape = 's32[1]{0}', space=sflag, size = 0x4, scoped, tag = 'scoped memory for tpu_custom_call.1']
    #allocation10 [shape = 'u8[2048]{0}', space=vmem, size = 0x800, scoped, tag = 'input window, operand 4, single buffered']
    #allocation11 [shape = 'u8[16384]{0}', space=vmem, size = 0x4000, scoped, tag = 'output window, operand 0, single buffered']
    %10 = vsyncpa [#allocation3], 0
    %11 = vsyncpa [#allocation6], 0
    %12 = vsyncpa [#allocation9], 0
    %13 = vsyncpa [#allocation4], 0
    // Predicated region
    $region2: #{tpu_custom_call.1} parent=1 // pred_check
      _
    $region3: #{tpu_custom_call.1} parent=1 // pred_check_branch
      %15 = sbr.rel (0) target = $region5
    $region4: #{tpu_custom_call.1} parent=1 // pred_region
      %s17 = ssub.s32 512, 512
      %18 = vsyncadd [#allocation3], %s17
      %s19 = sshll.u32 [#allocation2], 4
      %s20 = int_to_ptr.vmem [resolvable:$true] %s19
      %25 = dma.hbm_to_vmem [thread:$0]  %s0, 512, %s20, [#allocation3], 128, 128, 8
    $region5: #{tpu_custom_call.1} parent=1 // pred_fallthru
      _
    // Predicated region
    $region6: #{tpu_custom_call.1} parent=1 // pred_check
      _
    $region7: #{tpu_custom_call.1} parent=1 // pred_check_branch
      %27 = sbr.rel (0) target = $region9
    $region8: #{tpu_custom_call.1} parent=1 // pred_region
      %s29 = ssub.s32 16, 16
      %30 = vsyncadd [#allocation6], %s29
      %s32 = sshll.u32 [#allocation5], 4
      %s33 = int_to_ptr.vmem [resolvable:$true] %s32
      %35 = dma.hbm_to_vmem [thread:$0]  %s1, 16, %s33, [#allocation6]
    $region9: #{tpu_custom_call.1} parent=1 // pred_fallthru
      _
    // Predicated region
    $region10: #{tpu_custom_call.1} parent=1 // pred_check
      _
    $region11: #{tpu_custom_call.1} parent=1 // pred_check_branch
      %37 = sbr.rel (0) target = $region13
    $region12: #{tpu_custom_call.1} parent=1 // pred_region
      %s39 = ssub.s32 16, 16
      %40 = vsyncadd [#allocation6], %s39
      %s42 = sshll.u32 [#allocation7], 4
      %s43 = int_to_ptr.vmem [resolvable:$true] %s42
      %45 = dma.hbm_to_vmem [thread:$0]  %s2, 16, %s43, [#allocation6]
    $region13: #{tpu_custom_call.1} parent=1 // pred_fallthru
      _
    // Predicated region
    $region14: #{tpu_custom_call.1} parent=1 // pred_check
      _
    $region15: #{tpu_custom_call.1} parent=1 // pred_check_branch
      %47 = sbr.rel (0) target = $region17
    $region16: #{tpu_custom_call.1} parent=1 // pred_region
      %s49 = ssub.s32 2048, 2048
      %50 = vsyncadd [#allocation9], %s49
      %s51 = sshll.u32 [#allocation8], 4
      %s52 = int_to_ptr.vmem [resolvable:$true] %s51
      %57 = dma.hbm_to_vmem [thread:$0]  %s3, 2048, %s52, [#allocation9], 128, 128, 8
    $region17: #{tpu_custom_call.1} parent=1 // pred_fallthru
      _
    // Predicated region
    $region18: #{tpu_custom_call.1} parent=1 // pred_check
      _
    $region19: #{tpu_custom_call.1} parent=1 // pred_check_branch
      %59 = sbr.rel (0) target = $region21
    $region20: #{tpu_custom_call.1} parent=1 // pred_region
      %s61 = ssub.s32 64, 64
      %62 = vsyncadd [#allocation9], %s61
      %s64 = sshll.u32 [#allocation10], 4
      %s65 = int_to_ptr.vmem [resolvable:$true] %s64
      %67 = dma.hbm_to_vmem [thread:$0]  %s4, 64, %s65, [#allocation9]
    $region21: #{tpu_custom_call.1} parent=1 // pred_fallthru
      _
    // Predicated region
    $region22: #{tpu_custom_call.1} parent=1 // pred_check
      _
    $region23: #{tpu_custom_call.1} parent=1 // pred_check_branch
      %69 = sbr.rel (0) target = $region25
    $region24: #{tpu_custom_call.1} parent=1 // pred_region
      %70 = dma.done [#allocation3], 512
    $region25: #{tpu_custom_call.1} parent=1 // pred_fallthru
      _
    // Predicated region
    $region26: #{tpu_custom_call.1} parent=1 // pred_check
      _
    $region27: #{tpu_custom_call.1} parent=1 // pred_check_branch
      %72 = sbr.rel (0) target = $region29
    $region28: #{tpu_custom_call.1} parent=1 // pred_region
      %73 = dma.done [#allocation6], 16
    $region29: #{tpu_custom_call.1} parent=1 // pred_fallthru
      _
    // Predicated region
    $region30: #{tpu_custom_call.1} parent=1 // pred_check
      _
    $region31: #{tpu_custom_call.1} parent=1 // pred_check_branch
      %75 = sbr.rel (0) target = $region33
    $region32: #{tpu_custom_call.1} parent=1 // pred_region
      %76 = dma.done [#allocation6], 16
    $region33: #{tpu_custom_call.1} parent=1 // pred_fallthru
      _
    // Predicated region
    $region34: #{tpu_custom_call.1} parent=1 // pred_check
      _
    $region35: #{tpu_custom_call.1} parent=1 // pred_check_branch
      %78 = sbr.rel (0) target = $region37
    $region36: #{tpu_custom_call.1} parent=1 // pred_region
      %79 = dma.done [#allocation9], 2048
    $region37: #{tpu_custom_call.1} parent=1 // pred_fallthru
      _
    // Predicated region
    $region38: #{tpu_custom_call.1} parent=1 // pred_check
      _
    $region39: #{tpu_custom_call.1} parent=1 // pred_check_branch
      %81 = sbr.rel (0) target = $region41
    $region40: #{tpu_custom_call.1} parent=1 // pred_region
      %82 = dma.done [#allocation9], 64
    $region41: #{tpu_custom_call.1} parent=1 // pred_fallthru
      _
    %v83 = vld [vmem:[#allocation2] sm:$0xff]
    %v84 = vld [vmem:[#allocation2 + $0x8] sm:$0xff]
    %v85 = vld [vmem:[#allocation2 + $0x10] sm:$0xff]
    %v86 = vld [vmem:[#allocation2 + $0x18] sm:$0xff]
    %v87 = vld [vmem:[#allocation8] sm:$0xff]
    %v88 = vld [vmem:[#allocation8 + $0x8] sm:$0xff]
    %v89 = vld [vmem:[#allocation8 + $0x10] sm:$0xff]
    %v90 = vld [vmem:[#allocation8 + $0x18] sm:$0xff]
    %v91 = vld [vmem:[#allocation8 + $0x20] sm:$0xff]
    %v92 = vld [vmem:[#allocation8 + $0x28] sm:$0xff]
    %v93 = vld [vmem:[#allocation8 + $0x30] sm:$0xff]
    %v94 = vld [vmem:[#allocation8 + $0x38] sm:$0xff]
    %v95 = vld [vmem:[#allocation8 + $0x40] sm:$0xff]
    %v96 = vld [vmem:[#allocation8 + $0x48] sm:$0xff]
    %v97 = vld [vmem:[#allocation8 + $0x50] sm:$0xff]
    %v98 = vld [vmem:[#allocation8 + $0x58] sm:$0xff]
    %v99 = vld [vmem:[#allocation8 + $0x60] sm:$0xff]
    %v100 = vld [vmem:[#allocation8 + $0x68] sm:$0xff]
    %v101 = vld [vmem:[#allocation8 + $0x70] sm:$0xff]
    %v102 = vld [vmem:[#allocation8 + $0x78] sm:$0xff]
    %v103 = vld [vmem:[#allocation10] sm:$0xf]
    %104 = vmatprep.subr.mxu0 0.0
    %v105 = vand.u32 %v87, 4294901760
    %106 = vmatpush1.msra.mxu0 %v105
    %107 = vmatprep.subr.mxu0 0.0
    %v108 = vand.u32 %v88, 4294901760
    %109 = vmatpush1.msra.mxu0 %v108
    %110 = vmatprep.subr.mxu0 0.0
    %v111 = vand.u32 %v89, 4294901760
    %112 = vmatpush1.msra.mxu0 %v111
    %113 = vmatprep.subr.mxu0 0.0
    %v114 = vand.u32 %v90, 4294901760
    %115 = vmatpush1.msra.mxu0 %v114
    %116 = vmatprep.subr.mxu0 0.0
    %v117 = vand.u32 %v91, 4294901760
    %118 = vmatpush1.msra.mxu0 %v117
    %119 = vmatprep.subr.mxu0 0.0
    %v120 = vand.u32 %v92, 4294901760
    %121 = vmatpush1.msra.mxu0 %v120
    %122 = vmatprep.subr.mxu0 0.0
    %v123 = vand.u32 %v93, 4294901760
    %124 = vmatpush1.msra.mxu0 %v123
    %125 = vmatprep.subr.mxu0 0.0
    %v126 = vand.u32 %v94, 4294901760
    %127 = vmatpush1.msra.mxu0 %v126
    %128 = vmatprep.subr.mxu0 0.0
    %v129 = vand.u32 %v95, 4294901760
    %130 = vmatpush1.msra.mxu0 %v129
    %131 = vmatprep.subr.mxu0 0.0
    %v132 = vand.u32 %v96, 4294901760
    %133 = vmatpush1.msra.mxu0 %v132
    %134 = vmatprep.subr.mxu0 0.0
    %v135 = vand.u32 %v97, 4294901760
    %136 = vmatpush1.msra.mxu0 %v135
    %137 = vmatprep.subr.mxu0 0.0
    %v138 = vand.u32 %v98, 4294901760
    %139 = vmatpush1.msra.mxu0 %v138
    %140 = vmatprep.subr.mxu0 0.0
    %v141 = vand.u32 %v99, 4294901760
    %142 = vmatpush1.msra.mxu0 %v141
    %143 = vmatprep.subr.mxu0 0.0
    %v144 = vand.u32 %v100, 4294901760
    %145 = vmatpush1.msra.mxu0 %v144
    %146 = vmatprep.subr.mxu0 0.0
    %v147 = vand.u32 %v101, 4294901760
    %148 = vmatpush1.msra.mxu0 %v147
    %149 = vmatprep.subr.mxu0 0.0
    %v150 = vand.u32 %v102, 4294901760
    %151 = vmatpush1.msra.mxu0 %v150
    %152 = vmatprep.subr.mxu0 0.0
    %153 = vmatpush1.msra.mxu0 0.0
    %154 = vmatprep.subr.mxu0 0.0
    %155 = vmatpush1.msra.mxu0 0.0
    %156 = vmatprep.subr.mxu0 0.0
    %157 = vmatpush1.msra.mxu0 0.0
    %158 = vmatprep.subr.mxu0 0.0
    %159 = vmatpush1.msra.mxu0 0.0
    %160 = vmatprep.subr.mxu0 0.0
    %161 = vmatpush1.msra.mxu0 0.0
    %162 = vmatprep.subr.mxu0 0.0
    %163 = vmatpush1.msra.mxu0 0.0
    %164 = vmatprep.subr.mxu0 0.0
    %165 = vmatpush1.msra.mxu0 0.0
    %166 = vmatprep.subr.mxu0 0.0
    %167 = vmatpush1.msra.mxu0 0.0
    %168 = vmatprep.subr.mxu0 0.0
    %169 = vmatpush1.msra.mxu0 0.0
    %170 = vmatprep.subr.mxu0 0.0
    %171 = vmatpush1.msra.mxu0 0.0
    %172 = vmatprep.subr.mxu0 0.0
    %173 = vmatpush1.msra.mxu0 0.0
    %174 = vmatprep.subr.mxu0 0.0
    %175 = vmatpush1.msra.mxu0 0.0
    %176 = vmatprep.subr.mxu0 0.0
    %177 = vmatpush1.msra.mxu0 0.0
    %178 = vmatprep.subr.mxu0 0.0
    %179 = vmatpush1.msra.mxu0 0.0
    %180 = vmatprep.subr.mxu0 0.0
    %181 = vmatpush1.msra.mxu0 0.0
    %182 = vmatprep.subr.mxu0 0.0
    %183 = vmatpush1.msra.mxu0 0.0
    %184 = vmatprep.mubr.f32.mxu0 0.0
    %v185 = vand.u32 %v83, 4294901760
    %v186 = vsub.f32 %v83, %v185
    %v187 = vand.u32 %v186, 4294901760
    %v188 = vsub.f32 %v186, %v187
    %v189 = vand.u32 %v188, 4294901760
    %190 = vmatmul.mubr.f32.gmra.mrb[0].mxu0 %v189
    %v191 = vpop.f32.mrb[0].mxu0
    %v192 = vadd.f32 0.0, %v191
    %v193 = vpop.f32.mrb[0].mxu0
    %194 = vmatprep.mubr.f32.mxu0 0.0
    %v195 = vand.u32 %v84, 4294901760
    %v196 = vsub.f32 %v84, %v195
    %v197 = vand.u32 %v196, 4294901760
    %v198 = vsub.f32 %v196, %v197
    %v199 = vand.u32 %v198, 4294901760
    %200 = vmatmul.mubr.f32.gmra.mrb[0].mxu0 %v199
    %v201 = vpop.f32.mrb[0].mxu0
    %v202 = vadd.f32 0.0, %v201
    %v203 = vpop.f32.mrb[0].mxu0
    %204 = vmatprep.mubr.f32.mxu0 0.0
    %v205 = vand.u32 %v85, 4294901760
    %v206 = vsub.f32 %v85, %v205
    %v207 = vand.u32 %v206, 4294901760
    %v208 = vsub.f32 %v206, %v207
    %v209 = vand.u32 %v208, 4294901760
    %210 = vmatmul.mubr.f32.gmra.mrb[0].mxu0 %v209
    %v211 = vpop.f32.mrb[0].mxu0
    %v212 = vadd.f32 0.0, %v211
    %v213 = vpop.f32.mrb[0].mxu0
    %214 = vmatprep.mubr.f32.mxu0 0.0
    %v215 = vand.u32 %v86, 4294901760
    %v216 = vsub.f32 %v86, %v215
    %v217 = vand.u32 %v216, 4294901760
    %v218 = vsub.f32 %v216, %v217
    %v219 = vand.u32 %v218, 4294901760
    %220 = vmatmul.mubr.f32.gmra.mrb[0].mxu0 %v219
    %v221 = vpop.f32.mrb[0].mxu0
    %v222 = vadd.f32 0.0, %v221
    %v223 = vpop.f32.mrb[0].mxu0
    %224 = vdwg.mxu0
    %225 = vmatprep.subr.mxu0 0.0
    %v226 = vand.u32 %v87, 4294901760
    %v227 = vsub.f32 %v87, %v226
    %v228 = vand.u32 %v227, 4294901760
    %v229 = vsub.f32 %v227, %v228
    %v230 = vand.u32 %v229, 4294901760
    %231 = vmatpush1.msra.mxu0 %v230
    %232 = vmatprep.subr.mxu0 0.0
    %v233 = vand.u32 %v88, 4294901760
    %v234 = vsub.f32 %v88, %v233
    %v235 = vand.u32 %v234, 4294901760
    %v236 = vsub.f32 %v234, %v235
    %v237 = vand.u32 %v236, 4294901760
    %238 = vmatpush1.msra.mxu0 %v237
    %239 = vmatprep.subr.mxu0 0.0
    %v240 = vand.u32 %v89, 4294901760
    %v241 = vsub.f32 %v89, %v240
    %v242 = vand.u32 %v241, 4294901760
    %v243 = vsub.f32 %v241, %v242
    %v244 = vand.u32 %v243, 4294901760
    %245 = vmatpush1.msra.mxu0 %v244
    %246 = vmatprep.subr.mxu0 0.0
    %v247 = vand.u32 %v90, 4294901760
    %v248 = vsub.f32 %v90, %v247
    %v249 = vand.u32 %v248, 4294901760
    %v250 = vsub.f32 %v248, %v249
    %v251 = vand.u32 %v250, 4294901760
    %252 = vmatpush1.msra.mxu0 %v251
    %253 = vmatprep.subr.mxu0 0.0
    %v254 = vand.u32 %v91, 4294901760
    %v255 = vsub.f32 %v91, %v254
    %v256 = vand.u32 %v255, 4294901760
    %v257 = vsub.f32 %v255, %v256
    %v258 = vand.u32 %v257, 4294901760
    %259 = vmatpush1.msra.mxu0 %v258
    %260 = vmatprep.subr.mxu0 0.0
    %v261 = vand.u32 %v92, 4294901760
    %v262 = vsub.f32 %v92, %v261
    %v263 = vand.u32 %v262, 4294901760
    %v264 = vsub.f32 %v262, %v263
    %v265 = vand.u32 %v264, 4294901760
    %266 = vmatpush1.msra.mxu0 %v265
    %267 = vmatprep.subr.mxu0 0.0
    %v268 = vand.u32 %v93, 4294901760
    %v269 = vsub.f32 %v93, %v268
    %v270 = vand.u32 %v269, 4294901760
    %v271 = vsub.f32 %v269, %v270
    %v272 = vand.u32 %v271, 4294901760
    %273 = vmatpush1.msra.mxu0 %v272
    %274 = vmatprep.subr.mxu0 0.0
    %v275 = vand.u32 %v94, 4294901760
    %v276 = vsub.f32 %v94, %v275
    %v277 = vand.u32 %v276, 4294901760
    %v278 = vsub.f32 %v276, %v277
    %v279 = vand.u32 %v278, 4294901760
    %280 = vmatpush1.msra.mxu0 %v279
    %281 = vmatprep.subr.mxu0 0.0
    %v282 = vand.u32 %v95, 4294901760
    %v283 = vsub.f32 %v95, %v282
    %v284 = vand.u32 %v283, 4294901760
    %v285 = vsub.f32 %v283, %v284
    %v286 = vand.u32 %v285, 4294901760
    %287 = vmatpush1.msra.mxu0 %v286
    %288 = vmatprep.subr.mxu0 0.0
    %v289 = vand.u32 %v96, 4294901760
    %v290 = vsub.f32 %v96, %v289
    %v291 = vand.u32 %v290, 4294901760
    %v292 = vsub.f32 %v290, %v291
    %v293 = vand.u32 %v292, 4294901760
    %294 = vmatpush1.msra.mxu0 %v293
    %295 = vmatprep.subr.mxu0 0.0
    %v296 = vand.u32 %v97, 4294901760
    %v297 = vsub.f32 %v97, %v296
    %v298 = vand.u32 %v297, 4294901760
    %v299 = vsub.f32 %v297, %v298
    %v300 = vand.u32 %v299, 4294901760
    %301 = vmatpush1.msra.mxu0 %v300
    %302 = vmatprep.subr.mxu0 0.0
    %v303 = vand.u32 %v98, 4294901760
    %v304 = vsub.f32 %v98, %v303
    %v305 = vand.u32 %v304, 4294901760
    %v306 = vsub.f32 %v304, %v305
    %v307 = vand.u32 %v306, 4294901760
    %308 = vmatpush1.msra.mxu0 %v307
    %309 = vmatprep.subr.mxu0 0.0
    %v310 = vand.u32 %v99, 4294901760
    %v311 = vsub.f32 %v99, %v310
    %v312 = vand.u32 %v311, 4294901760
    %v313 = vsub.f32 %v311, %v312
    %v314 = vand.u32 %v313, 4294901760
    %315 = vmatpush1.msra.mxu0 %v314
    %316 = vmatprep.subr.mxu0 0.0
    %v317 = vand.u32 %v100, 4294901760
    %v318 = vsub.f32 %v100, %v317
    %v319 = vand.u32 %v318, 4294901760
    %v320 = vsub.f32 %v318, %v319
    %v321 = vand.u32 %v320, 4294901760
    %322 = vmatpush1.msra.mxu0 %v321
    %323 = vmatprep.subr.mxu0 0.0
    %v324 = vand.u32 %v101, 4294901760
    %v325 = vsub.f32 %v101, %v324
    %v326 = vand.u32 %v325, 4294901760
    %v327 = vsub.f32 %v325, %v326
    %v328 = vand.u32 %v327, 4294901760
    %329 = vmatpush1.msra.mxu0 %v328
    %330 = vmatprep.subr.mxu0 0.0
    %v331 = vand.u32 %v102, 4294901760
    %v332 = vsub.f32 %v102, %v331
    %v333 = vand.u32 %v332, 4294901760
    %v334 = vsub.f32 %v332, %v333
    %v335 = vand.u32 %v334, 4294901760
    %336 = vmatpush1.msra.mxu0 %v335
    %337 = vmatprep.subr.mxu0 0.0
    %338 = vmatpush1.msra.mxu0 0.0
    %339 = vmatprep.subr.mxu0 0.0
    %340 = vmatpush1.msra.mxu0 0.0
    %341 = vmatprep.subr.mxu0 0.0
    %342 = vmatpush1.msra.mxu0 0.0
    %343 = vmatprep.subr.mxu0 0.0
    %344 = vmatpush1.msra.mxu0 0.0
    %345 = vmatprep.subr.mxu0 0.0
    %346 = vmatpush1.msra.mxu0 0.0
    %347 = vmatprep.subr.mxu0 0.0
    %348 = vmatpush1.msra.mxu0 0.0
    %349 = vmatprep.subr.mxu0 0.0
    %350 = vmatpush1.msra.mxu0 0.0
    %351 = vmatprep.subr.mxu0 0.0
    %352 = vmatpush1.msra.mxu0 0.0
    %353 = vmatprep.subr.mxu0 0.0
    %354 = vmatpush1.msra.mxu0 0.0
    %355 = vmatprep.subr.mxu0 0.0
    %356 = vmatpush1.msra.mxu0 0.0
    %357 = vmatprep.subr.mxu0 0.0
    %358 = vmatpush1.msra.mxu0 0.0
    %359 = vmatprep.subr.mxu0 0.0
    %360 = vmatpush1.msra.mxu0 0.0
    %361 = vmatprep.subr.mxu0 0.0
    %362 = vmatpush1.msra.mxu0 0.0
    %363 = vmatprep.subr.mxu0 0.0
    %364 = vmatpush1.msra.mxu0 0.0
    %365 = vmatprep.subr.mxu0 0.0
    %366 = vmatpush1.msra.mxu0 0.0
    %367 = vmatprep.subr.mxu0 0.0
    %368 = vmatpush1.msra.mxu0 0.0
    %369 = vmatprep.mubr.f32.mxu0 0.0
    %v370 = vand.u32 %v83, 4294901760
    %371 = vmatmul.mubr.f32.gmra.mrb[0].mxu0 %v370
    %v372 = vpop.f32.mrb[0].mxu0
    %v373 = vadd.f32 %v192, %v372
    %v374 = vpop.f32.mrb[0].mxu0
    %375 = vmatprep.mubr.f32.mxu0 0.0
    %v376 = vand.u32 %v84, 4294901760
    %377 = vmatmul.mubr.f32.gmra.mrb[0].mxu0 %v376
    %v378 = vpop.f32.mrb[0].mxu0
    %v379 = vadd.f32 %v202, %v378
    %v380 = vpop.f32.mrb[0].mxu0
    %381 = vmatprep.mubr.f32.mxu0 0.0
    %v382 = vand.u32 %v85, 4294901760
    %383 = vmatmul.mubr.f32.gmra.mrb[0].mxu0 %v382
    %v384 = vpop.f32.mrb[0].mxu0
    %v385 = vadd.f32 %v212, %v384
    %v386 = vpop.f32.mrb[0].mxu0
    %387 = vmatprep.mubr.f32.mxu0 0.0
    %v388 = vand.u32 %v86, 4294901760
    %389 = vmatmul.mubr.f32.gmra.mrb[0].mxu0 %v388
    %v390 = vpop.f32.mrb[0].mxu0
    %v391 = vadd.f32 %v222, %v390
    %v392 = vpop.f32.mrb[0].mxu0
    %393 = vdwg.mxu0
    %394 = vmatprep.subr.mxu0 0.0
    %v395 = vand.u32 %v87, 4294901760
    %v396 = vsub.f32 %v87, %v395
    %397 = vmatpush1.msra.mxu0 %v396
    %398 = vmatprep.subr.mxu0 0.0
    %v399 = vand.u32 %v88, 4294901760
    %v400 = vsub.f32 %v88, %v399
    %401 = vmatpush1.msra.mxu0 %v400
    %402 = vmatprep.subr.mxu0 0.0
    %v403 = vand.u32 %v89, 4294901760
    %v404 = vsub.f32 %v89, %v403
    %405 = vmatpush1.msra.mxu0 %v404
    %406 = vmatprep.subr.mxu0 0.0
    %v407 = vand.u32 %v90, 4294901760
    %v408 = vsub.f32 %v90, %v407
    %409 = vmatpush1.msra.mxu0 %v408
    %410 = vmatprep.subr.mxu0 0.0
    %v411 = vand.u32 %v91, 4294901760
    %v412 = vsub.f32 %v91, %v411
    %413 = vmatpush1.msra.mxu0 %v412
    %414 = vmatprep.subr.mxu0 0.0
    %v415 = vand.u32 %v92, 4294901760
    %v416 = vsub.f32 %v92, %v415
    %417 = vmatpush1.msra.mxu0 %v416
    %418 = vmatprep.subr.mxu0 0.0
    %v419 = vand.u32 %v93, 4294901760
    %v420 = vsub.f32 %v93, %v419
    %421 = vmatpush1.msra.mxu0 %v420
    %422 = vmatprep.subr.mxu0 0.0
    %v423 = vand.u32 %v94, 4294901760
    %v424 = vsub.f32 %v94, %v423
    %425 = vmatpush1.msra.mxu0 %v424
    %426 = vmatprep.subr.mxu0 0.0
    %v427 = vand.u32 %v95, 4294901760
    %v428 = vsub.f32 %v95, %v427
    %429 = vmatpush1.msra.mxu0 %v428
    %430 = vmatprep.subr.mxu0 0.0
    %v431 = vand.u32 %v96, 4294901760
    %v432 = vsub.f32 %v96, %v431
    %433 = vmatpush1.msra.mxu0 %v432
    %434 = vmatprep.subr.mxu0 0.0
    %v435 = vand.u32 %v97, 4294901760
    %v436 = vsub.f32 %v97, %v435
    %437 = vmatpush1.msra.mxu0 %v436
    %438 = vmatprep.subr.mxu0 0.0
    %v439 = vand.u32 %v98, 4294901760
    %v440 = vsub.f32 %v98, %v439
    %441 = vmatpush1.msra.mxu0 %v440
    %442 = vmatprep.subr.mxu0 0.0
    %v443 = vand.u32 %v99, 4294901760
    %v444 = vsub.f32 %v99, %v443
    %445 = vmatpush1.msra.mxu0 %v444
    %446 = vmatprep.subr.mxu0 0.0
    %v447 = vand.u32 %v100, 4294901760
    %v448 = vsub.f32 %v100, %v447
    %449 = vmatpush1.msra.mxu0 %v448
    %450 = vmatprep.subr.mxu0 0.0
    %v451 = vand.u32 %v101, 4294901760
    %v452 = vsub.f32 %v101, %v451
    %453 = vmatpush1.msra.mxu0 %v452
    %454 = vmatprep.subr.mxu0 0.0
    %v455 = vand.u32 %v102, 4294901760
    %v456 = vsub.f32 %v102, %v455
    %457 = vmatpush1.msra.mxu0 %v456
    %458 = vmatprep.subr.mxu0 0.0
    %459 = vmatpush1.msra.mxu0 0.0
    %460 = vmatprep.subr.mxu0 0.0
    %461 = vmatpush1.msra.mxu0 0.0
    %462 = vmatprep.subr.mxu0 0.0
    %463 = vmatpush1.msra.mxu0 0.0
    %464 = vmatprep.subr.mxu0 0.0
    %465 = vmatpush1.msra.mxu0 0.0
    %466 = vmatprep.subr.mxu0 0.0
    %467 = vmatpush1.msra.mxu0 0.0
    %468 = vmatprep.subr.mxu0 0.0
    %469 = vmatpush1.msra.mxu0 0.0
    %470 = vmatprep.subr.mxu0 0.0
    %471 = vmatpush1.msra.mxu0 0.0
    %472 = vmatprep.subr.mxu0 0.0
    %473 = vmatpush1.msra.mxu0 0.0
    %474 = vmatprep.subr.mxu0 0.0
    %475 = vmatpush1.msra.mxu0 0.0
    %476 = vmatprep.subr.mxu0 0.0
    %477 = vmatpush1.msra.mxu0 0.0
    %478 = vmatprep.subr.mxu0 0.0
    %479 = vmatpush1.msra.mxu0 0.0
    %480 = vmatprep.subr.mxu0 0.0
    %481 = vmatpush1.msra.mxu0 0.0
    %482 = vmatprep.subr.mxu0 0.0
    %483 = vmatpush1.msra.mxu0 0.0
    %484 = vmatprep.subr.mxu0 0.0
    %485 = vmatpush1.msra.mxu0 0.0
    %486 = vmatprep.subr.mxu0 0.0
    %487 = vmatpush1.msra.mxu0 0.0
    %488 = vmatprep.subr.mxu0 0.0
    %489 = vmatpush1.msra.mxu0 0.0
    %490 = vmatprep.mubr.f32.mxu0 0.0
    %v491 = vand.u32 %v83, 4294901760
    %v492 = vsub.f32 %v83, %v491
    %493 = vmatmul.mubr.f32.gmra.mrb[0].mxu0 %v492
    %v494 = vpop.f32.mrb[0].mxu0
    %v495 = vadd.f32 %v373, %v494
    %v496 = vpop.f32.mrb[0].mxu0
    %497 = vmatprep.mubr.f32.mxu0 0.0
    %v498 = vand.u32 %v84, 4294901760
    %v499 = vsub.f32 %v84, %v498
    %500 = vmatmul.mubr.f32.gmra.mrb[0].mxu0 %v499
    %v501 = vpop.f32.mrb[0].mxu0
    %v502 = vadd.f32 %v379, %v501
    %v503 = vpop.f32.mrb[0].mxu0
    %504 = vmatprep.mubr.f32.mxu0 0.0
    %v505 = vand.u32 %v85, 4294901760
    %v506 = vsub.f32 %v85, %v505
    %507 = vmatmul.mubr.f32.gmra.mrb[0].mxu0 %v506
    %v508 = vpop.f32.mrb[0].mxu0
    %v509 = vadd.f32 %v385, %v508
    %v510 = vpop.f32.mrb[0].mxu0
    %511 = vmatprep.mubr.f32.mxu0 0.0
    %v512 = vand.u32 %v86, 4294901760
    %v513 = vsub.f32 %v86, %v512
    %514 = vmatmul.mubr.f32.gmra.mrb[0].mxu0 %v513
    %v515 = vpop.f32.mrb[0].mxu0
    %v516 = vadd.f32 %v391, %v515
    %v517 = vpop.f32.mrb[0].mxu0
    %518 = vdwg.mxu0
    %519 = vmatprep.subr.mxu0 0.0
    %v520 = vand.u32 %v87, 4294901760
    %521 = vmatpush1.msra.mxu0 %v520
    %522 = vmatprep.subr.mxu0 0.0
    %v523 = vand.u32 %v88, 4294901760
    %524 = vmatpush1.msra.mxu0 %v523
    %525 = vmatprep.subr.mxu0 0.0
    %v526 = vand.u32 %v89, 4294901760
    %527 = vmatpush1.msra.mxu0 %v526
    %528 = vmatprep.subr.mxu0 0.0
    %v529 = vand.u32 %v90, 4294901760
    %530 = vmatpush1.msra.mxu0 %v529
    %531 = vmatprep.subr.mxu0 0.0
    %v532 = vand.u32 %v91, 4294901760
    %533 = vmatpush1.msra.mxu0 %v532
    %534 = vmatprep.subr.mxu0 0.0
    %v535 = vand.u32 %v92, 4294901760
    %536 = vmatpush1.msra.mxu0 %v535
    %537 = vmatprep.subr.mxu0 0.0
    %v538 = vand.u32 %v93, 4294901760
    %539 = vmatpush1.msra.mxu0 %v538
    %540 = vmatprep.subr.mxu0 0.0
    %v541 = vand.u32 %v94, 4294901760
    %542 = vmatpush1.msra.mxu0 %v541
    %543 = vmatprep.subr.mxu0 0.0
    %v544 = vand.u32 %v95, 4294901760
    %545 = vmatpush1.msra.mxu0 %v544
    %546 = vmatprep.subr.mxu0 0.0
    %v547 = vand.u32 %v96, 4294901760
    %548 = vmatpush1.msra.mxu0 %v547
    %549 = vmatprep.subr.mxu0 0.0
    %v550 = vand.u32 %v97, 4294901760
    %551 = vmatpush1.msra.mxu0 %v550
    %552 = vmatprep.subr.mxu0 0.0
    %v553 = vand.u32 %v98, 4294901760
    %554 = vmatpush1.msra.mxu0 %v553
    %555 = vmatprep.subr.mxu0 0.0
    %v556 = vand.u32 %v99, 4294901760
    %557 = vmatpush1.msra.mxu0 %v556
    %558 = vmatprep.subr.mxu0 0.0
    %v559 = vand.u32 %v100, 4294901760
    %560 = vmatpush1.msra.mxu0 %v559
    %561 = vmatprep.subr.mxu0 0.0
    %v562 = vand.u32 %v101, 4294901760
    %563 = vmatpush1.msra.mxu0 %v562
    %564 = vmatprep.subr.mxu0 0.0
    %v565 = vand.u32 %v102, 4294901760
    %566 = vmatpush1.msra.mxu0 %v565
    %567 = vmatprep.subr.mxu0 0.0
    %568 = vmatpush1.msra.mxu0 0.0
    %569 = vmatprep.subr.mxu0 0.0
    %570 = vmatpush1.msra.mxu0 0.0
    %571 = vmatprep.subr.mxu0 0.0
    %572 = vmatpush1.msra.mxu0 0.0
    %573 = vmatprep.subr.mxu0 0.0
    %574 = vmatpush1.msra.mxu0 0.0
    %575 = vmatprep.subr.mxu0 0.0
    %576 = vmatpush1.msra.mxu0 0.0
    %577 = vmatprep.subr.mxu0 0.0
    %578 = vmatpush1.msra.mxu0 0.0
    %579 = vmatprep.subr.mxu0 0.0
    %580 = vmatpush1.msra.mxu0 0.0
    %581 = vmatprep.subr.mxu0 0.0
    %582 = vmatpush1.msra.mxu0 0.0
    %583 = vmatprep.subr.mxu0 0.0
    %584 = vmatpush1.msra.mxu0 0.0
    %585 = vmatprep.subr.mxu0 0.0
    %586 = vmatpush1.msra.mxu0 0.0
    %587 = vmatprep.subr.mxu0 0.0
    %588 = vmatpush1.msra.mxu0 0.0
    %589 = vmatprep.subr.mxu0 0.0
    %590 = vmatpush1.msra.mxu0 0.0
    %591 = vmatprep.subr.mxu0 0.0
    %592 = vmatpush1.msra.mxu0 0.0
    %593 = vmatprep.subr.mxu0 0.0
    %594 = vmatpush1.msra.mxu0 0.0
    %595 = vmatprep.subr.mxu0 0.0
    %596 = vmatpush1.msra.mxu0 0.0
    %597 = vmatprep.subr.mxu0 0.0
    %598 = vmatpush1.msra.mxu0 0.0
    %599 = vmatprep.mubr.f32.mxu0 0.0
    %v600 = vand.u32 %v83, 4294901760
    %v601 = vsub.f32 %v83, %v600
    %v602 = vand.u32 %v601, 4294901760
    %603 = vmatmul.mubr.f32.gmra.mrb[0].mxu0 %v602
    %v604 = vpop.f32.mrb[0].mxu0
    %v605 = vadd.f32 %v495, %v604
    %v606 = vpop.f32.mrb[0].mxu0
    %607 = vmatprep.mubr.f32.mxu0 0.0
    %v608 = vand.u32 %v84, 4294901760
    %v609 = vsub.f32 %v84, %v608
    %v610 = vand.u32 %v609, 4294901760
    %611 = vmatmul.mubr.f32.gmra.mrb[0].mxu0 %v610
    %v612 = vpop.f32.mrb[0].mxu0
    %v613 = vadd.f32 %v502, %v612
    %v614 = vpop.f32.mrb[0].mxu0
    %615 = vmatprep.mubr.f32.mxu0 0.0
    %v616 = vand.u32 %v85, 4294901760
    %v617 = vsub.f32 %v85, %v616
    %v618 = vand.u32 %v617, 4294901760
    %619 = vmatmul.mubr.f32.gmra.mrb[0].mxu0 %v618
    %v620 = vpop.f32.mrb[0].mxu0
    %v621 = vadd.f32 %v509, %v620
    %v622 = vpop.f32.mrb[0].mxu0
    %623 = vmatprep.mubr.f32.mxu0 0.0
    %v624 = vand.u32 %v86, 4294901760
    %v625 = vsub.f32 %v86, %v624
    %v626 = vand.u32 %v625, 4294901760
    %627 = vmatmul.mubr.f32.gmra.mrb[0].mxu0 %v626
    %v628 = vpop.f32.mrb[0].mxu0
    %v629 = vadd.f32 %v516, %v628
    %v630 = vpop.f32.mrb[0].mxu0
    %631 = vdwg.mxu0
    %632 = vmatprep.subr.mxu0 0.0
    %v633 = vand.u32 %v87, 4294901760
    %v634 = vsub.f32 %v87, %v633
    %v635 = vand.u32 %v634, 4294901760
    %636 = vmatpush1.msra.mxu0 %v635
    %637 = vmatprep.subr.mxu0 0.0
    %v638 = vand.u32 %v88, 4294901760
    %v639 = vsub.f32 %v88, %v638
    %v640 = vand.u32 %v639, 4294901760
    %641 = vmatpush1.msra.mxu0 %v640
    %642 = vmatprep.subr.mxu0 0.0
    %v643 = vand.u32 %v89, 4294901760
    %v644 = vsub.f32 %v89, %v643
    %v645 = vand.u32 %v644, 4294901760
    %646 = vmatpush1.msra.mxu0 %v645
    %647 = vmatprep.subr.mxu0 0.0
    %v648 = vand.u32 %v90, 4294901760
    %v649 = vsub.f32 %v90, %v648
    %v650 = vand.u32 %v649, 4294901760
    %651 = vmatpush1.msra.mxu0 %v650
    %652 = vmatprep.subr.mxu0 0.0
    %v653 = vand.u32 %v91, 4294901760
    %v654 = vsub.f32 %v91, %v653
    %v655 = vand.u32 %v654, 4294901760
    %656 = vmatpush1.msra.mxu0 %v655
    %657 = vmatprep.subr.mxu0 0.0
    %v658 = vand.u32 %v92, 4294901760
    %v659 = vsub.f32 %v92, %v658
    %v660 = vand.u32 %v659, 4294901760
    %661 = vmatpush1.msra.mxu0 %v660
    %662 = vmatprep.subr.mxu0 0.0
    %v663 = vand.u32 %v93, 4294901760
    %v664 = vsub.f32 %v93, %v663
    %v665 = vand.u32 %v664, 4294901760
    %666 = vmatpush1.msra.mxu0 %v665
    %667 = vmatprep.subr.mxu0 0.0
    %v668 = vand.u32 %v94, 4294901760
    %v669 = vsub.f32 %v94, %v668
    %v670 = vand.u32 %v669, 4294901760
    %671 = vmatpush1.msra.mxu0 %v670
    %672 = vmatprep.subr.mxu0 0.0
    %v673 = vand.u32 %v95, 4294901760
    %v674 = vsub.f32 %v95, %v673
    %v675 = vand.u32 %v674, 4294901760
    %676 = vmatpush1.msra.mxu0 %v675
    %677 = vmatprep.subr.mxu0 0.0
    %v678 = vand.u32 %v96, 4294901760
    %v679 = vsub.f32 %v96, %v678
    %v680 = vand.u32 %v679, 4294901760
    %681 = vmatpush1.msra.mxu0 %v680
    %682 = vmatprep.subr.mxu0 0.0
    %v683 = vand.u32 %v97, 4294901760
    %v684 = vsub.f32 %v97, %v683
    %v685 = vand.u32 %v684, 4294901760
    %686 = vmatpush1.msra.mxu0 %v685
    %687 = vmatprep.subr.mxu0 0.0
    %v688 = vand.u32 %v98, 4294901760
    %v689 = vsub.f32 %v98, %v688
    %v690 = vand.u32 %v689, 4294901760
    %691 = vmatpush1.msra.mxu0 %v690
    %692 = vmatprep.subr.mxu0 0.0
    %v693 = vand.u32 %v99, 4294901760
    %v694 = vsub.f32 %v99, %v693
    %v695 = vand.u32 %v694, 4294901760
    %696 = vmatpush1.msra.mxu0 %v695
    %697 = vmatprep.subr.mxu0 0.0
    %v698 = vand.u32 %v100, 4294901760
    %v699 = vsub.f32 %v100, %v698
    %v700 = vand.u32 %v699, 4294901760
    %701 = vmatpush1.msra.mxu0 %v700
    %702 = vmatprep.subr.mxu0 0.0
    %v703 = vand.u32 %v101, 4294901760
    %v704 = vsub.f32 %v101, %v703
    %v705 = vand.u32 %v704, 4294901760
    %706 = vmatpush1.msra.mxu0 %v705
    %707 = vmatprep.subr.mxu0 0.0
    %v708 = vand.u32 %v102, 4294901760
    %v709 = vsub.f32 %v102, %v708
    %v710 = vand.u32 %v709, 4294901760
    %711 = vmatpush1.msra.mxu0 %v710
    %712 = vmatprep.subr.mxu0 0.0
    %713 = vmatpush1.msra.mxu0 0.0
    %714 = vmatprep.subr.mxu0 0.0
    %715 = vmatpush1.msra.mxu0 0.0
    %716 = vmatprep.subr.mxu0 0.0
    %717 = vmatpush1.msra.mxu0 0.0
    %718 = vmatprep.subr.mxu0 0.0
    %719 = vmatpush1.msra.mxu0 0.0
    %720 = vmatprep.subr.mxu0 0.0
    %721 = vmatpush1.msra.mxu0 0.0
    %722 = vmatprep.subr.mxu0 0.0
    %723 = vmatpush1.msra.mxu0 0.0
    %724 = vmatprep.subr.mxu0 0.0
    %725 = vmatpush1.msra.mxu0 0.0
    %726 = vmatprep.subr.mxu0 0.0
    %727 = vmatpush1.msra.mxu0 0.0
    %728 = vmatprep.subr.mxu0 0.0
    %729 = vmatpush1.msra.mxu0 0.0
    %730 = vmatprep.subr.mxu0 0.0
    %731 = vmatpush1.msra.mxu0 0.0
    %732 = vmatprep.subr.mxu0 0.0
    %733 = vmatpush1.msra.mxu0 0.0
    %734 = vmatprep.subr.mxu0 0.0
    %735 = vmatpush1.msra.mxu0 0.0
    %736 = vmatprep.subr.mxu0 0.0
    %737 = vmatpush1.msra.mxu0 0.0
    %738 = vmatprep.subr.mxu0 0.0
    %739 = vmatpush1.msra.mxu0 0.0
    %740 = vmatprep.subr.mxu0 0.0
    %741 = vmatpush1.msra.mxu0 0.0
    %742 = vmatprep.subr.mxu0 0.0
    %743 = vmatpush1.msra.mxu0 0.0
    %744 = vmatprep.mubr.f32.mxu0 0.0
    %v745 = vand.u32 %v83, 4294901760
    %746 = vmatmul.mubr.f32.gmra.mrb[0].mxu0 %v745
    %v747 = vpop.f32.mrb[0].mxu0
    %v748 = vadd.f32 %v605, %v747
    %v749 = vpop.f32.mrb[0].mxu0
    %750 = vmatprep.mubr.f32.mxu0 0.0
    %v751 = vand.u32 %v84, 4294901760
    %752 = vmatmul.mubr.f32.gmra.mrb[0].mxu0 %v751
    %v753 = vpop.f32.mrb[0].mxu0
    %v754 = vadd.f32 %v613, %v753
    %v755 = vpop.f32.mrb[0].mxu0
    %756 = vmatprep.mubr.f32.mxu0 0.0
    %v757 = vand.u32 %v85, 4294901760
    %758 = vmatmul.mubr.f32.gmra.mrb[0].mxu0 %v757
    %v759 = vpop.f32.mrb[0].mxu0
    %v760 = vadd.f32 %v621, %v759
    %v761 = vpop.f32.mrb[0].mxu0
    %762 = vmatprep.mubr.f32.mxu0 0.0
    %v763 = vand.u32 %v86, 4294901760
    %764 = vmatmul.mubr.f32.gmra.mrb[0].mxu0 %v763
    %v765 = vpop.f32.mrb[0].mxu0
    %v766 = vadd.f32 %v629, %v765
    %v767 = vpop.f32.mrb[0].mxu0
    %768 = vdwg.mxu0
    %769 = vmatprep.subr.mxu0 0.0
    %v770 = vand.u32 %v87, 4294901760
    %771 = vmatpush1.msra.mxu0 %v770
    %772 = vmatprep.subr.mxu0 0.0
    %v773 = vand.u32 %v88, 4294901760
    %774 = vmatpush1.msra.mxu0 %v773
    %775 = vmatprep.subr.mxu0 0.0
    %v776 = vand.u32 %v89, 4294901760
    %777 = vmatpush1.msra.mxu0 %v776
    %778 = vmatprep.subr.mxu0 0.0
    %v779 = vand.u32 %v90, 4294901760
    %780 = vmatpush1.msra.mxu0 %v779
    %781 = vmatprep.subr.mxu0 0.0
    %v782 = vand.u32 %v91, 4294901760
    %783 = vmatpush1.msra.mxu0 %v782
    %784 = vmatprep.subr.mxu0 0.0
    %v785 = vand.u32 %v92, 4294901760
    %786 = vmatpush1.msra.mxu0 %v785
    %787 = vmatprep.subr.mxu0 0.0
    %v788 = vand.u32 %v93, 4294901760
    %789 = vmatpush1.msra.mxu0 %v788
    %790 = vmatprep.subr.mxu0 0.0
    %v791 = vand.u32 %v94, 4294901760
    %792 = vmatpush1.msra.mxu0 %v791
    %793 = vmatprep.subr.mxu0 0.0
    %v794 = vand.u32 %v95, 4294901760
    %795 = vmatpush1.msra.mxu0 %v794
    %796 = vmatprep.subr.mxu0 0.0
    %v797 = vand.u32 %v96, 4294901760
    %798 = vmatpush1.msra.mxu0 %v797
    %799 = vmatprep.subr.mxu0 0.0
    %v800 = vand.u32 %v97, 4294901760
    %801 = vmatpush1.msra.mxu0 %v800
    %802 = vmatprep.subr.mxu0 0.0
    %v803 = vand.u32 %v98, 4294901760
    %804 = vmatpush1.msra.mxu0 %v803
    %805 = vmatprep.subr.mxu0 0.0
    %v806 = vand.u32 %v99, 4294901760
    %807 = vmatpush1.msra.mxu0 %v806
    %808 = vmatprep.subr.mxu0 0.0
    %v809 = vand.u32 %v100, 4294901760
    %810 = vmatpush1.msra.mxu0 %v809
    %811 = vmatprep.subr.mxu0 0.0
    %v812 = vand.u32 %v101, 4294901760
    %813 = vmatpush1.msra.mxu0 %v812
    %814 = vmatprep.subr.mxu0 0.0
    %v815 = vand.u32 %v102, 4294901760
    %816 = vmatpush1.msra.mxu0 %v815
    %817 = vmatprep.subr.mxu0 0.0
    %818 = vmatpush1.msra.mxu0 0.0
    %819 = vmatprep.subr.mxu0 0.0
    %820 = vmatpush1.msra.mxu0 0.0
    %821 = vmatprep.subr.mxu0 0.0
    %822 = vmatpush1.msra.mxu0 0.0
    %823 = vmatprep.subr.mxu0 0.0
    %824 = vmatpush1.msra.mxu0 0.0
    %825 = vmatprep.subr.mxu0 0.0
    %826 = vmatpush1.msra.mxu0 0.0
    %827 = vmatprep.subr.mxu0 0.0
    %828 = vmatpush1.msra.mxu0 0.0
    %829 = vmatprep.subr.mxu0 0.0
    %830 = vmatpush1.msra.mxu0 0.0
    %831 = vmatprep.subr.mxu0 0.0
    %832 = vmatpush1.msra.mxu0 0.0
    %833 = vmatprep.subr.mxu0 0.0
    %834 = vmatpush1.msra.mxu0 0.0
    %835 = vmatprep.subr.mxu0 0.0
    %836 = vmatpush1.msra.mxu0 0.0
    %837 = vmatprep.subr.mxu0 0.0
    %838 = vmatpush1.msra.mxu0 0.0
    %839 = vmatprep.subr.mxu0 0.0
    %840 = vmatpush1.msra.mxu0 0.0
    %841 = vmatprep.subr.mxu0 0.0
    %842 = vmatpush1.msra.mxu0 0.0
    %843 = vmatprep.subr.mxu0 0.0
    %844 = vmatpush1.msra.mxu0 0.0
    %845 = vmatprep.subr.mxu0 0.0
    %846 = vmatpush1.msra.mxu0 0.0
    %847 = vmatprep.subr.mxu0 0.0
    %848 = vmatpush1.msra.mxu0 0.0
    %849 = vmatprep.mubr.f32.mxu0 0.0
    %v850 = vand.u32 %v83, 4294901760
    %851 = vmatmul.mubr.f32.gmra.mrb[0].mxu0 %v850
    %v852 = vpop.f32.mrb[0].mxu0
    %v853 = vadd.f32 %v748, %v852
    %v854 = vpop.f32.mrb[0].mxu0
    %855 = vmatprep.mubr.f32.mxu0 0.0
    %v856 = vand.u32 %v84, 4294901760
    %857 = vmatmul.mubr.f32.gmra.mrb[0].mxu0 %v856
    %v858 = vpop.f32.mrb[0].mxu0
    %v859 = vadd.f32 %v754, %v858
    %v860 = vpop.f32.mrb[0].mxu0
    %861 = vmatprep.mubr.f32.mxu0 0.0
    %v862 = vand.u32 %v85, 4294901760
    %863 = vmatmul.mubr.f32.gmra.mrb[0].mxu0 %v862
    %v864 = vpop.f32.mrb[0].mxu0
    %v865 = vadd.f32 %v760, %v864
    %v866 = vpop.f32.mrb[0].mxu0
    %867 = vmatprep.mubr.f32.mxu0 0.0
    %v868 = vand.u32 %v86, 4294901760
    %869 = vmatmul.mubr.f32.gmra.mrb[0].mxu0 %v868
    %v870 = vpop.f32.mrb[0].mxu0
    %v871 = vadd.f32 %v766, %v870
    %v872 = vpop.f32.mrb[0].mxu0
    %873 = vdwg.mxu0
    %v874 = vmul.f32 %v853, 0.03125
    %v875 = vmul.f32 %v859, 0.03125
    %v876 = vmul.f32 %v865, 0.03125
    %v877 = vmul.f32 %v871, 0.03125
    %vm878 = vcmask 31744
    %v880 = vsel %vm878, %v874, 0
    %v883 = vsel %vm878, %v875, 0
    %v886 = vsel %vm878, %v876, 0
    %v889 = vsel %vm878, %v877, 0
    %vm891 = vcmask 1043456
    %v893 = vsel %vm891, %v103, 0
    %895 = vmatprep.subr.mxu0 0.0
    %v896 = vand.u32 %v893, 4294901760
    %897 = vmatpush1.msra.mxu0 %v896
    %898 = vmatprep.subr.mxu0 0.0
    %899 = vmatpush1.msra.mxu0 0.0
    %900 = vmatprep.subr.mxu0 0.0
    %901 = vmatpush1.msra.mxu0 0.0
    %902 = vmatprep.subr.mxu0 0.0
    %903 = vmatpush1.msra.mxu0 0.0
    %904 = vmatprep.subr.mxu0 0.0
    %905 = vmatpush1.msra.mxu0 0.0
    %906 = vmatprep.subr.mxu0 0.0
    %907 = vmatpush1.msra.mxu0 0.0
    %908 = vmatprep.subr.mxu0 0.0
    %909 = vmatpush1.msra.mxu0 0.0
    %910 = vmatprep.subr.mxu0 0.0
    %911 = vmatpush1.msra.mxu0 0.0
    %912 = vmatprep.subr.mxu0 0.0
    %913 = vmatpush1.msra.mxu0 0.0
    %914 = vmatprep.subr.mxu0 0.0
    %915 = vmatpush1.msra.mxu0 0.0
    %916 = vmatprep.subr.mxu0 0.0
    %917 = vmatpush1.msra.mxu0 0.0
    %918 = vmatprep.subr.mxu0 0.0
    %919 = vmatpush1.msra.mxu0 0.0
    %920 = vmatprep.subr.mxu0 0.0
    %921 = vmatpush1.msra.mxu0 0.0
    %922 = vmatprep.subr.mxu0 0.0
    %923 = vmatpush1.msra.mxu0 0.0
    %924 = vmatprep.subr.mxu0 0.0
    %925 = vmatpush1.msra.mxu0 0.0
    %926 = vmatprep.subr.mxu0 0.0
    %927 = vmatpush1.msra.mxu0 0.0
    %928 = vmatprep.subr.mxu0 0.0
    %929 = vmatpush1.msra.mxu0 0.0
    %930 = vmatprep.subr.mxu0 0.0
    %931 = vmatpush1.msra.mxu0 0.0
    %932 = vmatprep.subr.mxu0 0.0
    %933 = vmatpush1.msra.mxu0 0.0
    %934 = vmatprep.subr.mxu0 0.0
    %935 = vmatpush1.msra.mxu0 0.0
    %936 = vmatprep.subr.mxu0 0.0
    %937 = vmatpush1.msra.mxu0 0.0
    %938 = vmatprep.subr.mxu0 0.0
    %939 = vmatpush1.msra.mxu0 0.0
    %940 = vmatprep.subr.mxu0 0.0
    %941 = vmatpush1.msra.mxu0 0.0
    %942 = vmatprep.subr.mxu0 0.0
    %943 = vmatpush1.msra.mxu0 0.0
    %944 = vmatprep.subr.mxu0 0.0
    %945 = vmatpush1.msra.mxu0 0.0
    %946 = vmatprep.subr.mxu0 0.0
    %947 = vmatpush1.msra.mxu0 0.0
    %948 = vmatprep.subr.mxu0 0.0
    %949 = vmatpush1.msra.mxu0 0.0
    %950 = vmatprep.subr.mxu0 0.0
    %951 = vmatpush1.msra.mxu0 0.0
    %952 = vmatprep.subr.mxu0 0.0
    %953 = vmatpush1.msra.mxu0 0.0
    %954 = vmatprep.subr.mxu0 0.0
    %955 = vmatpush1.msra.mxu0 0.0
    %956 = vmatprep.subr.mxu0 0.0
    %957 = vmatpush1.msra.mxu0 0.0
    %958 = vmatprep.subr.mxu0 0.0
    %959 = vmatpush1.msra.mxu0 0.0
    %960 = vmatprep.mubr.f32.mxu0 0.0
    %v961 = vand.u32 %v880, 4294901760
    %v962 = vsub.f32 %v880, %v961
    %v963 = vand.u32 %v962, 4294901760
    %v964 = vsub.f32 %v962, %v963
    %v965 = vand.u32 %v964, 4294901760
    %966 = vmatmul.mubr.f32.gmra.mrb[0].mxu0 %v965
    %v967 = vpop.f32.mrb[0].mxu0
    %v968 = vadd.f32 0.0, %v967
    %v969 = vpop.f32.mrb[0].mxu0
    %970 = vmatprep.mubr.f32.mxu0 0.0
    %v971 = vand.u32 %v883, 4294901760
    %v972 = vsub.f32 %v883, %v971
    %v973 = vand.u32 %v972, 4294901760
    %v974 = vsub.f32 %v972, %v973
    %v975 = vand.u32 %v974, 4294901760
    %976 = vmatmul.mubr.f32.gmra.mrb[0].mxu0 %v975
    %v977 = vpop.f32.mrb[0].mxu0
    %v978 = vadd.f32 0.0, %v977
    %v979 = vpop.f32.mrb[0].mxu0
    %980 = vmatprep.mubr.f32.mxu0 0.0
    %v981 = vand.u32 %v886, 4294901760
    %v982 = vsub.f32 %v886, %v981
    %v983 = vand.u32 %v982, 4294901760
    %v984 = vsub.f32 %v982, %v983
    %v985 = vand.u32 %v984, 4294901760
    %986 = vmatmul.mubr.f32.gmra.mrb[0].mxu0 %v985
    %v987 = vpop.f32.mrb[0].mxu0
    %v988 = vadd.f32 0.0, %v987
    %v989 = vpop.f32.mrb[0].mxu0
    %990 = vmatprep.mubr.f32.mxu0 0.0
    %v991 = vand.u32 %v889, 4294901760
    %v992 = vsub.f32 %v889, %v991
    %v993 = vand.u32 %v992, 4294901760
    %v994 = vsub.f32 %v992, %v993
    %v995 = vand.u32 %v994, 4294901760
    %996 = vmatmul.mubr.f32.gmra.mrb[0].mxu0 %v995
    %v997 = vpop.f32.mrb[0].mxu0
    %v998 = vadd.f32 0.0, %v997
    %v999 = vpop.f32.mrb[0].mxu0
    %1000 = vdwg.mxu0
    %1001 = vmatprep.subr.mxu0 0.0
    %v1002 = vand.u32 %v893, 4294901760
    %v1003 = vsub.f32 %v893, %v1002
    %v1004 = vand.u32 %v1003, 4294901760
    %v1005 = vsub.f32 %v1003, %v1004
    %v1006 = vand.u32 %v1005, 4294901760
    %1007 = vmatpush1.msra.mxu0 %v1006
    %1008 = vmatprep.subr.mxu0 0.0
    %1009 = vmatpush1.msra.mxu0 0.0
    %1010 = vmatprep.subr.mxu0 0.0
    %1011 = vmatpush1.msra.mxu0 0.0
    %1012 = vmatprep.subr.mxu0 0.0
    %1013 = vmatpush1.msra.mxu0 0.0
    %1014 = vmatprep.subr.mxu0 0.0
    %1015 = vmatpush1.msra.mxu0 0.0
    %1016 = vmatprep.subr.mxu0 0.0
    %1017 = vmatpush1.msra.mxu0 0.0
    %1018 = vmatprep.subr.mxu0 0.0
    %1019 = vmatpush1.msra.mxu0 0.0
    %1020 = vmatprep.subr.mxu0 0.0
    %1021 = vmatpush1.msra.mxu0 0.0
    %1022 = vmatprep.subr.mxu0 0.0
    %1023 = vmatpush1.msra.mxu0 0.0
    %1024 = vmatprep.subr.mxu0 0.0
    %1025 = vmatpush1.msra.mxu0 0.0
    %1026 = vmatprep.subr.mxu0 0.0
    %1027 = vmatpush1.msra.mxu0 0.0
    %1028 = vmatprep.subr.mxu0 0.0
    %1029 = vmatpush1.msra.mxu0 0.0
    %1030 = vmatprep.subr.mxu0 0.0
    %1031 = vmatpush1.msra.mxu0 0.0
    %1032 = vmatprep.subr.mxu0 0.0
    %1033 = vmatpush1.msra.mxu0 0.0
    %1034 = vmatprep.subr.mxu0 0.0
    %1035 = vmatpush1.msra.mxu0 0.0
    %1036 = vmatprep.subr.mxu0 0.0
    %1037 = vmatpush1.msra.mxu0 0.0
    %1038 = vmatprep.subr.mxu0 0.0
    %1039 = vmatpush1.msra.mxu0 0.0
    %1040 = vmatprep.subr.mxu0 0.0
    %1041 = vmatpush1.msra.mxu0 0.0
    %1042 = vmatprep.subr.mxu0 0.0
    %1043 = vmatpush1.msra.mxu0 0.0
    %1044 = vmatprep.subr.mxu0 0.0
    %1045 = vmatpush1.msra.mxu0 0.0
    %1046 = vmatprep.subr.mxu0 0.0
    %1047 = vmatpush1.msra.mxu0 0.0
    %1048 = vmatprep.subr.mxu0 0.0
    %1049 = vmatpush1.msra.mxu0 0.0
    %1050 = vmatprep.subr.mxu0 0.0
    %1051 = vmatpush1.msra.mxu0 0.0
    %1052 = vmatprep.subr.mxu0 0.0
    %1053 = vmatpush1.msra.mxu0 0.0
    %1054 = vmatprep.subr.mxu0 0.0
    %1055 = vmatpush1.msra.mxu0 0.0
    %1056 = vmatprep.subr.mxu0 0.0
    %1057 = vmatpush1.msra.mxu0 0.0
    %1058 = vmatprep.subr.mxu0 0.0
    %1059 = vmatpush1.msra.mxu0 0.0
    %1060 = vmatprep.subr.mxu0 0.0
    %1061 = vmatpush1.msra.mxu0 0.0
    %1062 = vmatprep.subr.mxu0 0.0
    %1063 = vmatpush1.msra.mxu0 0.0
    %1064 = vmatprep.subr.mxu0 0.0
    %1065 = vmatpush1.msra.mxu0 0.0
    %1066 = vmatprep.subr.mxu0 0.0
    %1067 = vmatpush1.msra.mxu0 0.0
    %1068 = vmatprep.subr.mxu0 0.0
    %1069 = vmatpush1.msra.mxu0 0.0
    %1070 = vmatprep.mubr.f32.mxu0 0.0
    %v1071 = vand.u32 %v880, 4294901760
    %1072 = vmatmul.mubr.f32.gmra.mrb[0].mxu0 %v1071
    %v1073 = vpop.f32.mrb[0].mxu0
    %v1074 = vadd.f32 %v968, %v1073
    %v1075 = vpop.f32.mrb[0].mxu0
    %1076 = vmatprep.mubr.f32.mxu0 0.0
    %v1077 = vand.u32 %v883, 4294901760
    %1078 = vmatmul.mubr.f32.gmra.mrb[0].mxu0 %v1077
    %v1079 = vpop.f32.mrb[0].mxu0
    %v1080 = vadd.f32 %v978, %v1079
    %v1081 = vpop.f32.mrb[0].mxu0
    %1082 = vmatprep.mubr.f32.mxu0 0.0
    %v1083 = vand.u32 %v886, 4294901760
    %1084 = vmatmul.mubr.f32.gmra.mrb[0].mxu0 %v1083
    %v1085 = vpop.f32.mrb[0].mxu0
    %v1086 = vadd.f32 %v988, %v1085
    %v1087 = vpop.f32.mrb[0].mxu0
    %1088 = vmatprep.mubr.f32.mxu0 0.0
    %v1089 = vand.u32 %v889, 4294901760
    %1090 = vmatmul.mubr.f32.gmra.mrb[0].mxu0 %v1089
    %v1091 = vpop.f32.mrb[0].mxu0
    %v1092 = vadd.f32 %v998, %v1091
    %v1093 = vpop.f32.mrb[0].mxu0
    %1094 = vdwg.mxu0
    %1095 = vmatprep.subr.mxu0 0.0
    %v1096 = vand.u32 %v893, 4294901760
    %v1097 = vsub.f32 %v893, %v1096
    %1098 = vmatpush1.msra.mxu0 %v1097
    %1099 = vmatprep.subr.mxu0 0.0
    %1100 = vmatpush1.msra.mxu0 0.0
    %1101 = vmatprep.subr.mxu0 0.0
    %1102 = vmatpush1.msra.mxu0 0.0
    %1103 = vmatprep.subr.mxu0 0.0
    %1104 = vmatpush1.msra.mxu0 0.0
    %1105 = vmatprep.subr.mxu0 0.0
    %1106 = vmatpush1.msra.mxu0 0.0
    %1107 = vmatprep.subr.mxu0 0.0
    %1108 = vmatpush1.msra.mxu0 0.0
    %1109 = vmatprep.subr.mxu0 0.0
    %1110 = vmatpush1.msra.mxu0 0.0
    %1111 = vmatprep.subr.mxu0 0.0
    %1112 = vmatpush1.msra.mxu0 0.0
    %1113 = vmatprep.subr.mxu0 0.0
    %1114 = vmatpush1.msra.mxu0 0.0
    %1115 = vmatprep.subr.mxu0 0.0
    %1116 = vmatpush1.msra.mxu0 0.0
    %1117 = vmatprep.subr.mxu0 0.0
    %1118 = vmatpush1.msra.mxu0 0.0
    %1119 = vmatprep.subr.mxu0 0.0
    %1120 = vmatpush1.msra.mxu0 0.0
    %1121 = vmatprep.subr.mxu0 0.0
    %1122 = vmatpush1.msra.mxu0 0.0
    %1123 = vmatprep.subr.mxu0 0.0
    %1124 = vmatpush1.msra.mxu0 0.0
    %1125 = vmatprep.subr.mxu0 0.0
    %1126 = vmatpush1.msra.mxu0 0.0
    %1127 = vmatprep.subr.mxu0 0.0
    %1128 = vmatpush1.msra.mxu0 0.0
    %1129 = vmatprep.subr.mxu0 0.0
    %1130 = vmatpush1.msra.mxu0 0.0
    %1131 = vmatprep.subr.mxu0 0.0
    %1132 = vmatpush1.msra.mxu0 0.0
    %1133 = vmatprep.subr.mxu0 0.0
    %1134 = vmatpush1.msra.mxu0 0.0
    %1135 = vmatprep.subr.mxu0 0.0
    %1136 = vmatpush1.msra.mxu0 0.0
    %1137 = vmatprep.subr.mxu0 0.0
    %1138 = vmatpush1.msra.mxu0 0.0
    %1139 = vmatprep.subr.mxu0 0.0
    %1140 = vmatpush1.msra.mxu0 0.0
    %1141 = vmatprep.subr.mxu0 0.0
    %1142 = vmatpush1.msra.mxu0 0.0
    %1143 = vmatprep.subr.mxu0 0.0
    %1144 = vmatpush1.msra.mxu0 0.0
    %1145 = vmatprep.subr.mxu0 0.0
    %1146 = vmatpush1.msra.mxu0 0.0
    %1147 = vmatprep.subr.mxu0 0.0
    %1148 = vmatpush1.msra.mxu0 0.0
    %1149 = vmatprep.subr.mxu0 0.0
    %1150 = vmatpush1.msra.mxu0 0.0
    %1151 = vmatprep.subr.mxu0 0.0
    %1152 = vmatpush1.msra.mxu0 0.0
    %1153 = vmatprep.subr.mxu0 0.0
    %1154 = vmatpush1.msra.mxu0 0.0
    %1155 = vmatprep.subr.mxu0 0.0
    %1156 = vmatpush1.msra.mxu0 0.0
    %1157 = vmatprep.subr.mxu0 0.0
    %1158 = vmatpush1.msra.mxu0 0.0
    %1159 = vmatprep.subr.mxu0 0.0
    %1160 = vmatpush1.msra.mxu0 0.0
    %1161 = vmatprep.mubr.f32.mxu0 0.0
    %v1162 = vand.u32 %v880, 4294901760
    %v1163 = vsub.f32 %v880, %v1162
    %1164 = vmatmul.mubr.f32.gmra.mrb[0].mxu0 %v1163
    %v1165 = vpop.f32.mrb[0].mxu0
    %v1166 = vadd.f32 %v1074, %v1165
    %v1167 = vpop.f32.mrb[0].mxu0
    %1168 = vmatprep.mubr.f32.mxu0 0.0
    %v1169 = vand.u32 %v883, 4294901760
    %v1170 = vsub.f32 %v883, %v1169
    %1171 = vmatmul.mubr.f32.gmra.mrb[0].mxu0 %v1170
    %v1172 = vpop.f32.mrb[0].mxu0
    %v1173 = vadd.f32 %v1080, %v1172
    %v1174 = vpop.f32.mrb[0].mxu0
    %1175 = vmatprep.mubr.f32.mxu0 0.0
    %v1176 = vand.u32 %v886, 4294901760
    %v1177 = vsub.f32 %v886, %v1176
    %1178 = vmatmul.mubr.f32.gmra.mrb[0].mxu0 %v1177
    %v1179 = vpop.f32.mrb[0].mxu0
    %v1180 = vadd.f32 %v1086, %v1179
    %v1181 = vpop.f32.mrb[0].mxu0
    %1182 = vmatprep.mubr.f32.mxu0 0.0
    %v1183 = vand.u32 %v889, 4294901760
    %v1184 = vsub.f32 %v889, %v1183
    %1185 = vmatmul.mubr.f32.gmra.mrb[0].mxu0 %v1184
    %v1186 = vpop.f32.mrb[0].mxu0
    %v1187 = vadd.f32 %v1092, %v1186
    %v1188 = vpop.f32.mrb[0].mxu0
    %1189 = vdwg.mxu0
    %1190 = vmatprep.subr.mxu0 0.0
    %v1191 = vand.u32 %v893, 4294901760
    %1192 = vmatpush1.msra.mxu0 %v1191
    %1193 = vmatprep.subr.mxu0 0.0
    %1194 = vmatpush1.msra.mxu0 0.0
    %1195 = vmatprep.subr.mxu0 0.0
    %1196 = vmatpush1.msra.mxu0 0.0
    %1197 = vmatprep.subr.mxu0 0.0
    %1198 = vmatpush1.msra.mxu0 0.0
    %1199 = vmatprep.subr.mxu0 0.0
    %1200 = vmatpush1.msra.mxu0 0.0
    %1201 = vmatprep.subr.mxu0 0.0
    %1202 = vmatpush1.msra.mxu0 0.0
    %1203 = vmatprep.subr.mxu0 0.0
    %1204 = vmatpush1.msra.mxu0 0.0
    %1205 = vmatprep.subr.mxu0 0.0
    %1206 = vmatpush1.msra.mxu0 0.0
    %1207 = vmatprep.subr.mxu0 0.0
    %1208 = vmatpush1.msra.mxu0 0.0
    %1209 = vmatprep.subr.mxu0 0.0
    %1210 = vmatpush1.msra.mxu0 0.0
    %1211 = vmatprep.subr.mxu0 0.0
    %1212 = vmatpush1.msra.mxu0 0.0
    %1213 = vmatprep.subr.mxu0 0.0
    %1214 = vmatpush1.msra.mxu0 0.0
    %1215 = vmatprep.subr.mxu0 0.0
    %1216 = vmatpush1.msra.mxu0 0.0
    %1217 = vmatprep.subr.mxu0 0.0
    %1218 = vmatpush1.msra.mxu0 0.0
    %1219 = vmatprep.subr.mxu0 0.0
    %1220 = vmatpush1.msra.mxu0 0.0
    %1221 = vmatprep.subr.mxu0 0.0
    %1222 = vmatpush1.msra.mxu0 0.0
    %1223 = vmatprep.subr.mxu0 0.0
    %1224 = vmatpush1.msra.mxu0 0.0
    %1225 = vmatprep.subr.mxu0 0.0
    %1226 = vmatpush1.msra.mxu0 0.0
    %1227 = vmatprep.subr.mxu0 0.0
    %1228 = vmatpush1.msra.mxu0 0.0
    %1229 = vmatprep.subr.mxu0 0.0
    %1230 = vmatpush1.msra.mxu0 0.0
    %1231 = vmatprep.subr.mxu0 0.0
    %1232 = vmatpush1.msra.mxu0 0.0
    %1233 = vmatprep.subr.mxu0 0.0
    %1234 = vmatpush1.msra.mxu0 0.0
    %1235 = vmatprep.subr.mxu0 0.0
    %1236 = vmatpush1.msra.mxu0 0.0
    %1237 = vmatprep.subr.mxu0 0.0
    %1238 = vmatpush1.msra.mxu0 0.0
    %1239 = vmatprep.subr.mxu0 0.0
    %1240 = vmatpush1.msra.mxu0 0.0
    %1241 = vmatprep.subr.mxu0 0.0
    %1242 = vmatpush1.msra.mxu0 0.0
    %1243 = vmatprep.subr.mxu0 0.0
    %1244 = vmatpush1.msra.mxu0 0.0
    %1245 = vmatprep.subr.mxu0 0.0
    %1246 = vmatpush1.msra.mxu0 0.0
    %1247 = vmatprep.subr.mxu0 0.0
    %1248 = vmatpush1.msra.mxu0 0.0
    %1249 = vmatprep.subr.mxu0 0.0
    %1250 = vmatpush1.msra.mxu0 0.0
    %1251 = vmatprep.subr.mxu0 0.0
    %1252 = vmatpush1.msra.mxu0 0.0
    %1253 = vmatprep.subr.mxu0 0.0
    %1254 = vmatpush1.msra.mxu0 0.0
    %1255 = vmatprep.mubr.f32.mxu0 0.0
    %v1256 = vand.u32 %v880, 4294901760
    %v1257 = vsub.f32 %v880, %v1256
    %v1258 = vand.u32 %v1257, 4294901760
    %1259 = vmatmul.mubr.f32.gmra.mrb[0].mxu0 %v1258
    %v1260 = vpop.f32.mrb[0].mxu0
    %v1261 = vadd.f32 %v1166, %v1260
    %v1262 = vpop.f32.mrb[0].mxu0
    %1263 = vmatprep.mubr.f32.mxu0 0.0
    %v1264 = vand.u32 %v883, 4294901760
    %v1265 = vsub.f32 %v883, %v1264
    %v1266 = vand.u32 %v1265, 4294901760
    %1267 = vmatmul.mubr.f32.gmra.mrb[0].mxu0 %v1266
    %v1268 = vpop.f32.mrb[0].mxu0
    %v1269 = vadd.f32 %v1173, %v1268
    %v1270 = vpop.f32.mrb[0].mxu0
    %1271 = vmatprep.mubr.f32.mxu0 0.0
    %v1272 = vand.u32 %v886, 4294901760
    %v1273 = vsub.f32 %v886, %v1272
    %v1274 = vand.u32 %v1273, 4294901760
    %1275 = vmatmul.mubr.f32.gmra.mrb[0].mxu0 %v1274
    %v1276 = vpop.f32.mrb[0].mxu0
    %v1277 = vadd.f32 %v1180, %v1276
    %v1278 = vpop.f32.mrb[0].mxu0
    %1279 = vmatprep.mubr.f32.mxu0 0.0
    %v1280 = vand.u32 %v889, 4294901760
    %v1281 = vsub.f32 %v889, %v1280
    %v1282 = vand.u32 %v1281, 4294901760
    %1283 = vmatmul.mubr.f32.gmra.mrb[0].mxu0 %v1282
    %v1284 = vpop.f32.mrb[0].mxu0
    %v1285 = vadd.f32 %v1187, %v1284
    %v1286 = vpop.f32.mrb[0].mxu0
    %1287 = vdwg.mxu0
    %1288 = vmatprep.subr.mxu0 0.0
    %v1289 = vand.u32 %v893, 4294901760
    %v1290 = vsub.f32 %v893, %v1289
    %v1291 = vand.u32 %v1290, 4294901760
    %1292 = vmatpush1.msra.mxu0 %v1291
    %1293 = vmatprep.subr.mxu0 0.0
    %1294 = vmatpush1.msra.mxu0 0.0
    %1295 = vmatprep.subr.mxu0 0.0
    %1296 = vmatpush1.msra.mxu0 0.0
    %1297 = vmatprep.subr.mxu0 0.0
    %1298 = vmatpush1.msra.mxu0 0.0
    %1299 = vmatprep.subr.mxu0 0.0
    %1300 = vmatpush1.msra.mxu0 0.0
    %1301 = vmatprep.subr.mxu0 0.0
    %1302 = vmatpush1.msra.mxu0 0.0
    %1303 = vmatprep.subr.mxu0 0.0
    %1304 = vmatpush1.msra.mxu0 0.0
    %1305 = vmatprep.subr.mxu0 0.0
    %1306 = vmatpush1.msra.mxu0 0.0
    %1307 = vmatprep.subr.mxu0 0.0
    %1308 = vmatpush1.msra.mxu0 0.0
    %1309 = vmatprep.subr.mxu0 0.0
    %1310 = vmatpush1.msra.mxu0 0.0
    %1311 = vmatprep.subr.mxu0 0.0
    %1312 = vmatpush1.msra.mxu0 0.0
    %1313 = vmatprep.subr.mxu0 0.0
    %1314 = vmatpush1.msra.mxu0 0.0
    %1315 = vmatprep.subr.mxu0 0.0
    %1316 = vmatpush1.msra.mxu0 0.0
    %1317 = vmatprep.subr.mxu0 0.0
    %1318 = vmatpush1.msra.mxu0 0.0
    %1319 = vmatprep.subr.mxu0 0.0
    %1320 = vmatpush1.msra.mxu0 0.0
    %1321 = vmatprep.subr.mxu0 0.0
    %1322 = vmatpush1.msra.mxu0 0.0
    %1323 = vmatprep.subr.mxu0 0.0
    %1324 = vmatpush1.msra.mxu0 0.0
    %1325 = vmatprep.subr.mxu0 0.0
    %1326 = vmatpush1.msra.mxu0 0.0
    %1327 = vmatprep.subr.mxu0 0.0
    %1328 = vmatpush1.msra.mxu0 0.0
    %1329 = vmatprep.subr.mxu0 0.0
    %1330 = vmatpush1.msra.mxu0 0.0
    %1331 = vmatprep.subr.mxu0 0.0
    %1332 = vmatpush1.msra.mxu0 0.0
    %1333 = vmatprep.subr.mxu0 0.0
    %1334 = vmatpush1.msra.mxu0 0.0
    %1335 = vmatprep.subr.mxu0 0.0
    %1336 = vmatpush1.msra.mxu0 0.0
    %1337 = vmatprep.subr.mxu0 0.0
    %1338 = vmatpush1.msra.mxu0 0.0
    %1339 = vmatprep.subr.mxu0 0.0
    %1340 = vmatpush1.msra.mxu0 0.0
    %1341 = vmatprep.subr.mxu0 0.0
    %1342 = vmatpush1.msra.mxu0 0.0
    %1343 = vmatprep.subr.mxu0 0.0
    %1344 = vmatpush1.msra.mxu0 0.0
    %1345 = vmatprep.subr.mxu0 0.0
    %1346 = vmatpush1.msra.mxu0 0.0
    %1347 = vmatprep.subr.mxu0 0.0
    %1348 = vmatpush1.msra.mxu0 0.0
    %1349 = vmatprep.subr.mxu0 0.0
    %1350 = vmatpush1.msra.mxu0 0.0
    %1351 = vmatprep.subr.mxu0 0.0
    %1352 = vmatpush1.msra.mxu0 0.0
    %1353 = vmatprep.subr.mxu0 0.0
    %1354 = vmatpush1.msra.mxu0 0.0
    %1355 = vmatprep.mubr.f32.mxu0 0.0
    %v1356 = vand.u32 %v880, 4294901760
    %1357 = vmatmul.mubr.f32.gmra.mrb[0].mxu0 %v1356
    %v1358 = vpop.f32.mrb[0].mxu0
    %v1359 = vadd.f32 %v1261, %v1358
    %v1360 = vpop.f32.mrb[0].mxu0
    %1361 = vmatprep.mubr.f32.mxu0 0.0
    %v1362 = vand.u32 %v883, 4294901760
    %1363 = vmatmul.mubr.f32.gmra.mrb[0].mxu0 %v1362
    %v1364 = vpop.f32.mrb[0].mxu0
    %v1365 = vadd.f32 %v1269, %v1364
    %v1366 = vpop.f32.mrb[0].mxu0
    %1367 = vmatprep.mubr.f32.mxu0 0.0
    %v1368 = vand.u32 %v886, 4294901760
    %1369 = vmatmul.mubr.f32.gmra.mrb[0].mxu0 %v1368
    %v1370 = vpop.f32.mrb[0].mxu0
    %v1371 = vadd.f32 %v1277, %v1370
    %v1372 = vpop.f32.mrb[0].mxu0
    %1373 = vmatprep.mubr.f32.mxu0 0.0
    %v1374 = vand.u32 %v889, 4294901760
    %1375 = vmatmul.mubr.f32.gmra.mrb[0].mxu0 %v1374
    %v1376 = vpop.f32.mrb[0].mxu0
    %v1377 = vadd.f32 %v1285, %v1376
    %v1378 = vpop.f32.mrb[0].mxu0
    %1379 = vdwg.mxu0
    %1380 = vmatprep.subr.mxu0 0.0
    %v1381 = vand.u32 %v893, 4294901760
    %1382 = vmatpush1.msra.mxu0 %v1381
    %1383 = vmatprep.subr.mxu0 0.0
    %1384 = vmatpush1.msra.mxu0 0.0
    %1385 = vmatprep.subr.mxu0 0.0
    %1386 = vmatpush1.msra.mxu0 0.0
    %1387 = vmatprep.subr.mxu0 0.0
    %1388 = vmatpush1.msra.mxu0 0.0
    %1389 = vmatprep.subr.mxu0 0.0
    %1390 = vmatpush1.msra.mxu0 0.0
    %1391 = vmatprep.subr.mxu0 0.0
    %1392 = vmatpush1.msra.mxu0 0.0
    %1393 = vmatprep.subr.mxu0 0.0
    %1394 = vmatpush1.msra.mxu0 0.0
    %1395 = vmatprep.subr.mxu0 0.0
    %1396 = vmatpush1.msra.mxu0 0.0
    %1397 = vmatprep.subr.mxu0 0.0
    %1398 = vmatpush1.msra.mxu0 0.0
    %1399 = vmatprep.subr.mxu0 0.0
    %1400 = vmatpush1.msra.mxu0 0.0
    %1401 = vmatprep.subr.mxu0 0.0
    %1402 = vmatpush1.msra.mxu0 0.0
    %1403 = vmatprep.subr.mxu0 0.0
    %1404 = vmatpush1.msra.mxu0 0.0
    %1405 = vmatprep.subr.mxu0 0.0
    %1406 = vmatpush1.msra.mxu0 0.0
    %1407 = vmatprep.subr.mxu0 0.0
    %1408 = vmatpush1.msra.mxu0 0.0
    %1409 = vmatprep.subr.mxu0 0.0
    %1410 = vmatpush1.msra.mxu0 0.0
    %1411 = vmatprep.subr.mxu0 0.0
    %1412 = vmatpush1.msra.mxu0 0.0
    %1413 = vmatprep.subr.mxu0 0.0
    %1414 = vmatpush1.msra.mxu0 0.0
    %1415 = vmatprep.subr.mxu0 0.0
    %1416 = vmatpush1.msra.mxu0 0.0
    %1417 = vmatprep.subr.mxu0 0.0
    %1418 = vmatpush1.msra.mxu0 0.0
    %1419 = vmatprep.subr.mxu0 0.0
    %1420 = vmatpush1.msra.mxu0 0.0
    %1421 = vmatprep.subr.mxu0 0.0
    %1422 = vmatpush1.msra.mxu0 0.0
    %1423 = vmatprep.subr.mxu0 0.0
    %1424 = vmatpush1.msra.mxu0 0.0
    %1425 = vmatprep.subr.mxu0 0.0
    %1426 = vmatpush1.msra.mxu0 0.0
    %1427 = vmatprep.subr.mxu0 0.0
    %1428 = vmatpush1.msra.mxu0 0.0
    %1429 = vmatprep.subr.mxu0 0.0
    %1430 = vmatpush1.msra.mxu0 0.0
    %1431 = vmatprep.subr.mxu0 0.0
    %1432 = vmatpush1.msra.mxu0 0.0
    %1433 = vmatprep.subr.mxu0 0.0
    %1434 = vmatpush1.msra.mxu0 0.0
    %1435 = vmatprep.subr.mxu0 0.0
    %1436 = vmatpush1.msra.mxu0 0.0
    %1437 = vmatprep.subr.mxu0 0.0
    %1438 = vmatpush1.msra.mxu0 0.0
    %1439 = vmatprep.subr.mxu0 0.0
    %1440 = vmatpush1.msra.mxu0 0.0
    %1441 = vmatprep.subr.mxu0 0.0
    %1442 = vmatpush1.msra.mxu0 0.0
    %1443 = vmatprep.subr.mxu0 0.0
    %1444 = vmatpush1.msra.mxu0 0.0
    %1445 = vmatprep.mubr.f32.mxu0 0.0
    %v1446 = vand.u32 %v880, 4294901760
    %1447 = vmatmul.mubr.f32.gmra.mrb[0].mxu0 %v1446
    %v1448 = vpop.f32.mrb[0].mxu0
    %v1449 = vadd.f32 %v1359, %v1448
    %v1450 = vpop.f32.mrb[0].mxu0
    %1451 = vmatprep.mubr.f32.mxu0 0.0
    %v1452 = vand.u32 %v883, 4294901760
    %1453 = vmatmul.mubr.f32.gmra.mrb[0].mxu0 %v1452
    %v1454 = vpop.f32.mrb[0].mxu0
    %v1455 = vadd.f32 %v1365, %v1454
    %v1456 = vpop.f32.mrb[0].mxu0
    %1457 = vmatprep.mubr.f32.mxu0 0.0
    %v1458 = vand.u32 %v886, 4294901760
    %1459 = vmatmul.mubr.f32.gmra.mrb[0].mxu0 %v1458
    %v1460 = vpop.f32.mrb[0].mxu0
    %v1461 = vadd.f32 %v1371, %v1460
    %v1462 = vpop.f32.mrb[0].mxu0
    %1463 = vmatprep.mubr.f32.mxu0 0.0
    %v1464 = vand.u32 %v889, 4294901760
    %1465 = vmatmul.mubr.f32.gmra.mrb[0].mxu0 %v1464
    %v1466 = vpop.f32.mrb[0].mxu0
    %v1467 = vadd.f32 %v1377, %v1466
    %v1468 = vpop.f32.mrb[0].mxu0
    %1469 = vdwg.mxu0
    %v1470 = vsub.f32 %v83, %v1449
    %v1471 = vsub.f32 %v84, %v1455
    %v1472 = vsub.f32 %v85, %v1461
    %v1473 = vsub.f32 %v86, %v1467
    %v1474 = vmul.f32 %v1470, %v1470
    %v1475 = vmul.f32 %v1471, %v1471
    %v1476 = vmul.f32 %v1472, %v1472
    %v1477 = vmul.f32 %v1473, %v1473
    %1478 = vmatprep.subr.mxu0 0.0
    %v1479 = vand.u32 %v87, 4294901760
    %1480 = vmatpush1.msra.mxu0 %v1479
    %1481 = vmatprep.subr.mxu0 0.0
    %v1482 = vand.u32 %v88, 4294901760
    %1483 = vmatpush1.msra.mxu0 %v1482
    %1484 = vmatprep.subr.mxu0 0.0
    %v1485 = vand.u32 %v89, 4294901760
    %1486 = vmatpush1.msra.mxu0 %v1485
    %1487 = vmatprep.subr.mxu0 0.0
    %v1488 = vand.u32 %v90, 4294901760
    %1489 = vmatpush1.msra.mxu0 %v1488
    %1490 = vmatprep.subr.mxu0 0.0
    %v1491 = vand.u32 %v91, 4294901760
    %1492 = vmatpush1.msra.mxu0 %v1491
    %1493 = vmatprep.subr.mxu0 0.0
    %v1494 = vand.u32 %v92, 4294901760
    %1495 = vmatpush1.msra.mxu0 %v1494
    %1496 = vmatprep.subr.mxu0 0.0
    %v1497 = vand.u32 %v93, 4294901760
    %1498 = vmatpush1.msra.mxu0 %v1497
    %1499 = vmatprep.subr.mxu0 0.0
    %v1500 = vand.u32 %v94, 4294901760
    %1501 = vmatpush1.msra.mxu0 %v1500
    %1502 = vmatprep.subr.mxu0 0.0
    %v1503 = vand.u32 %v95, 4294901760
    %1504 = vmatpush1.msra.mxu0 %v1503
    %1505 = vmatprep.subr.mxu0 0.0
    %v1506 = vand.u32 %v96, 4294901760
    %1507 = vmatpush1.msra.mxu0 %v1506
    %1508 = vmatprep.subr.mxu0 0.0
    %v1509 = vand.u32 %v97, 4294901760
    %1510 = vmatpush1.msra.mxu0 %v1509
    %1511 = vmatprep.subr.mxu0 0.0
    %v1512 = vand.u32 %v98, 4294901760
    %1513 = vmatpush1.msra.mxu0 %v1512
    %1514 = vmatprep.subr.mxu0 0.0
    %v1515 = vand.u32 %v99, 4294901760
    %1516 = vmatpush1.msra.mxu0 %v1515
    %1517 = vmatprep.subr.mxu0 0.0
    %v1518 = vand.u32 %v100, 4294901760
    %1519 = vmatpush1.msra.mxu0 %v1518
    %1520 = vmatprep.subr.mxu0 0.0
    %v1521 = vand.u32 %v101, 4294901760
    %1522 = vmatpush1.msra.mxu0 %v1521
    %1523 = vmatprep.subr.mxu0 0.0
    %v1524 = vand.u32 %v102, 4294901760
    %1525 = vmatpush1.msra.mxu0 %v1524
    %1526 = vmatprep.subr.mxu0 0.0
    %1527 = vmatpush1.msra.mxu0 0.0
    %1528 = vmatprep.subr.mxu0 0.0
    %1529 = vmatpush1.msra.mxu0 0.0
    %1530 = vmatprep.subr.mxu0 0.0
    %1531 = vmatpush1.msra.mxu0 0.0
    %1532 = vmatprep.subr.mxu0 0.0
    %1533 = vmatpush1.msra.mxu0 0.0
    %1534 = vmatprep.subr.mxu0 0.0
    %1535 = vmatpush1.msra.mxu0 0.0
    %1536 = vmatprep.subr.mxu0 0.0
    %1537 = vmatpush1.msra.mxu0 0.0
    %1538 = vmatprep.subr.mxu0 0.0
    %1539 = vmatpush1.msra.mxu0 0.0
    %1540 = vmatprep.subr.mxu0 0.0
    %1541 = vmatpush1.msra.mxu0 0.0
    %1542 = vmatprep.subr.mxu0 0.0
    %1543 = vmatpush1.msra.mxu0 0.0
    %1544 = vmatprep.subr.mxu0 0.0
    %1545 = vmatpush1.msra.mxu0 0.0
    %1546 = vmatprep.subr.mxu0 0.0
    %1547 = vmatpush1.msra.mxu0 0.0
    %1548 = vmatprep.subr.mxu0 0.0
    %1549 = vmatpush1.msra.mxu0 0.0
    %1550 = vmatprep.subr.mxu0 0.0
    %1551 = vmatpush1.msra.mxu0 0.0
    %1552 = vmatprep.subr.mxu0 0.0
    %1553 = vmatpush1.msra.mxu0 0.0
    %1554 = vmatprep.subr.mxu0 0.0
    %1555 = vmatpush1.msra.mxu0 0.0
    %1556 = vmatprep.subr.mxu0 0.0
    %1557 = vmatpush1.msra.mxu0 0.0
    %1558 = vmatprep.mubr.f32.mxu0 0.0
    %v1559 = vand.u32 %v1474, 4294901760
    %v1560 = vsub.f32 %v1474, %v1559
    %v1561 = vand.u32 %v1560, 4294901760
    %v1562 = vsub.f32 %v1560, %v1561
    %v1563 = vand.u32 %v1562, 4294901760
    %1564 = vmatmul.mubr.f32.gmra.mrb[0].mxu0 %v1563
    %v1565 = vpop.f32.mrb[0].mxu0
    %v1566 = vadd.f32 0.0, %v1565
    %v1567 = vpop.f32.mrb[0].mxu0
    %1568 = vmatprep.mubr.f32.mxu0 0.0
    %v1569 = vand.u32 %v1475, 4294901760
    %v1570 = vsub.f32 %v1475, %v1569
    %v1571 = vand.u32 %v1570, 4294901760
    %v1572 = vsub.f32 %v1570, %v1571
    %v1573 = vand.u32 %v1572, 4294901760
    %1574 = vmatmul.mubr.f32.gmra.mrb[0].mxu0 %v1573
    %v1575 = vpop.f32.mrb[0].mxu0
    %v1576 = vadd.f32 0.0, %v1575
    %v1577 = vpop.f32.mrb[0].mxu0
    %1578 = vmatprep.mubr.f32.mxu0 0.0
    %v1579 = vand.u32 %v1476, 4294901760
    %v1580 = vsub.f32 %v1476, %v1579
    %v1581 = vand.u32 %v1580, 4294901760
    %v1582 = vsub.f32 %v1580, %v1581
    %v1583 = vand.u32 %v1582, 4294901760
    %1584 = vmatmul.mubr.f32.gmra.mrb[0].mxu0 %v1583
    %v1585 = vpop.f32.mrb[0].mxu0
    %v1586 = vadd.f32 0.0, %v1585
    %v1587 = vpop.f32.mrb[0].mxu0
    %1588 = vmatprep.mubr.f32.mxu0 0.0
    %v1589 = vand.u32 %v1477, 4294901760
    %v1590 = vsub.f32 %v1477, %v1589
    %v1591 = vand.u32 %v1590, 4294901760
    %v1592 = vsub.f32 %v1590, %v1591
    %v1593 = vand.u32 %v1592, 4294901760
    %1594 = vmatmul.mubr.f32.gmra.mrb[0].mxu0 %v1593
    %v1595 = vpop.f32.mrb[0].mxu0
    %v1596 = vadd.f32 0.0, %v1595
    %v1597 = vpop.f32.mrb[0].mxu0
    %1598 = vdwg.mxu0
    %1599 = vmatprep.subr.mxu0 0.0
    %v1600 = vand.u32 %v87, 4294901760
    %v1601 = vsub.f32 %v87, %v1600
    %v1602 = vand.u32 %v1601, 4294901760
    %v1603 = vsub.f32 %v1601, %v1602
    %v1604 = vand.u32 %v1603, 4294901760
    %1605 = vmatpush1.msra.mxu0 %v1604
    %1606 = vmatprep.subr.mxu0 0.0
    %v1607 = vand.u32 %v88, 4294901760
    %v1608 = vsub.f32 %v88, %v1607
    %v1609 = vand.u32 %v1608, 4294901760
    %v1610 = vsub.f32 %v1608, %v1609
    %v1611 = vand.u32 %v1610, 4294901760
    %1612 = vmatpush1.msra.mxu0 %v1611
    %1613 = vmatprep.subr.mxu0 0.0
    %v1614 = vand.u32 %v89, 4294901760
    %v1615 = vsub.f32 %v89, %v1614
    %v1616 = vand.u32 %v1615, 4294901760
    %v1617 = vsub.f32 %v1615, %v1616
    %v1618 = vand.u32 %v1617, 4294901760
    %1619 = vmatpush1.msra.mxu0 %v1618
    %1620 = vmatprep.subr.mxu0 0.0
    %v1621 = vand.u32 %v90, 4294901760
    %v1622 = vsub.f32 %v90, %v1621
    %v1623 = vand.u32 %v1622, 4294901760
    %v1624 = vsub.f32 %v1622, %v1623
    %v1625 = vand.u32 %v1624, 4294901760
    %1626 = vmatpush1.msra.mxu0 %v1625
    %1627 = vmatprep.subr.mxu0 0.0
    %v1628 = vand.u32 %v91, 4294901760
    %v1629 = vsub.f32 %v91, %v1628
    %v1630 = vand.u32 %v1629, 4294901760
    %v1631 = vsub.f32 %v1629, %v1630
    %v1632 = vand.u32 %v1631, 4294901760
    %1633 = vmatpush1.msra.mxu0 %v1632
    %1634 = vmatprep.subr.mxu0 0.0
    %v1635 = vand.u32 %v92, 4294901760
    %v1636 = vsub.f32 %v92, %v1635
    %v1637 = vand.u32 %v1636, 4294901760
    %v1638 = vsub.f32 %v1636, %v1637
    %v1639 = vand.u32 %v1638, 4294901760
    %1640 = vmatpush1.msra.mxu0 %v1639
    %1641 = vmatprep.subr.mxu0 0.0
    %v1642 = vand.u32 %v93, 4294901760
    %v1643 = vsub.f32 %v93, %v1642
    %v1644 = vand.u32 %v1643, 4294901760
    %v1645 = vsub.f32 %v1643, %v1644
    %v1646 = vand.u32 %v1645, 4294901760
    %1647 = vmatpush1.msra.mxu0 %v1646
    %1648 = vmatprep.subr.mxu0 0.0
    %v1649 = vand.u32 %v94, 4294901760
    %v1650 = vsub.f32 %v94, %v1649
    %v1651 = vand.u32 %v1650, 4294901760
    %v1652 = vsub.f32 %v1650, %v1651
    %v1653 = vand.u32 %v1652, 4294901760
    %1654 = vmatpush1.msra.mxu0 %v1653
    %1655 = vmatprep.subr.mxu0 0.0
    %v1656 = vand.u32 %v95, 4294901760
    %v1657 = vsub.f32 %v95, %v1656
    %v1658 = vand.u32 %v1657, 4294901760
    %v1659 = vsub.f32 %v1657, %v1658
    %v1660 = vand.u32 %v1659, 4294901760
    %1661 = vmatpush1.msra.mxu0 %v1660
    %1662 = vmatprep.subr.mxu0 0.0
    %v1663 = vand.u32 %v96, 4294901760
    %v1664 = vsub.f32 %v96, %v1663
    %v1665 = vand.u32 %v1664, 4294901760
    %v1666 = vsub.f32 %v1664, %v1665
    %v1667 = vand.u32 %v1666, 4294901760
    %1668 = vmatpush1.msra.mxu0 %v1667
    %1669 = vmatprep.subr.mxu0 0.0
    %v1670 = vand.u32 %v97, 4294901760
    %v1671 = vsub.f32 %v97, %v1670
    %v1672 = vand.u32 %v1671, 4294901760
    %v1673 = vsub.f32 %v1671, %v1672
    %v1674 = vand.u32 %v1673, 4294901760
    %1675 = vmatpush1.msra.mxu0 %v1674
    %1676 = vmatprep.subr.mxu0 0.0
    %v1677 = vand.u32 %v98, 4294901760
    %v1678 = vsub.f32 %v98, %v1677
    %v1679 = vand.u32 %v1678, 4294901760
    %v1680 = vsub.f32 %v1678, %v1679
    %v1681 = vand.u32 %v1680, 4294901760
    %1682 = vmatpush1.msra.mxu0 %v1681
    %1683 = vmatprep.subr.mxu0 0.0
    %v1684 = vand.u32 %v99, 4294901760
    %v1685 = vsub.f32 %v99, %v1684
    %v1686 = vand.u32 %v1685, 4294901760
    %v1687 = vsub.f32 %v1685, %v1686
    %v1688 = vand.u32 %v1687, 4294901760
    %1689 = vmatpush1.msra.mxu0 %v1688
    %1690 = vmatprep.subr.mxu0 0.0
    %v1691 = vand.u32 %v100, 4294901760
    %v1692 = vsub.f32 %v100, %v1691
    %v1693 = vand.u32 %v1692, 4294901760
    %v1694 = vsub.f32 %v1692, %v1693
    %v1695 = vand.u32 %v1694, 4294901760
    %1696 = vmatpush1.msra.mxu0 %v1695
    %1697 = vmatprep.subr.mxu0 0.0
    %v1698 = vand.u32 %v101, 4294901760
    %v1699 = vsub.f32 %v101, %v1698
    %v1700 = vand.u32 %v1699, 4294901760
    %v1701 = vsub.f32 %v1699, %v1700
    %v1702 = vand.u32 %v1701, 4294901760
    %1703 = vmatpush1.msra.mxu0 %v1702
    %1704 = vmatprep.subr.mxu0 0.0
    %v1705 = vand.u32 %v102, 4294901760
    %v1706 = vsub.f32 %v102, %v1705
    %v1707 = vand.u32 %v1706, 4294901760
    %v1708 = vsub.f32 %v1706, %v1707
    %v1709 = vand.u32 %v1708, 4294901760
    %1710 = vmatpush1.msra.mxu0 %v1709
    %1711 = vmatprep.subr.mxu0 0.0
    %1712 = vmatpush1.msra.mxu0 0.0
    %1713 = vmatprep.subr.mxu0 0.0
    %1714 = vmatpush1.msra.mxu0 0.0
    %1715 = vmatprep.subr.mxu0 0.0
    %1716 = vmatpush1.msra.mxu0 0.0
    %1717 = vmatprep.subr.mxu0 0.0
    %1718 = vmatpush1.msra.mxu0 0.0
    %1719 = vmatprep.subr.mxu0 0.0
    %1720 = vmatpush1.msra.mxu0 0.0
    %1721 = vmatprep.subr.mxu0 0.0
    %1722 = vmatpush1.msra.mxu0 0.0
    %1723 = vmatprep.subr.mxu0 0.0
    %1724 = vmatpush1.msra.mxu0 0.0
    %1725 = vmatprep.subr.mxu0 0.0
    %1726 = vmatpush1.msra.mxu0 0.0
    %1727 = vmatprep.subr.mxu0 0.0
    %1728 = vmatpush1.msra.mxu0 0.0
    %1729 = vmatprep.subr.mxu0 0.0
    %1730 = vmatpush1.msra.mxu0 0.0
    %1731 = vmatprep.subr.mxu0 0.0
    %1732 = vmatpush1.msra.mxu0 0.0
    %1733 = vmatprep.subr.mxu0 0.0
    %1734 = vmatpush1.msra.mxu0 0.0
    %1735 = vmatprep.subr.mxu0 0.0
    %1736 = vmatpush1.msra.mxu0 0.0
    %1737 = vmatprep.subr.mxu0 0.0
    %1738 = vmatpush1.msra.mxu0 0.0
    %1739 = vmatprep.subr.mxu0 0.0
    %1740 = vmatpush1.msra.mxu0 0.0
    %1741 = vmatprep.subr.mxu0 0.0
    %1742 = vmatpush1.msra.mxu0 0.0
    %1743 = vmatprep.mubr.f32.mxu0 0.0
    %v1744 = vand.u32 %v1474, 4294901760
    %1745 = vmatmul.mubr.f32.gmra.mrb[0].mxu0 %v1744
    %v1746 = vpop.f32.mrb[0].mxu0
    %v1747 = vadd.f32 %v1566, %v1746
    %v1748 = vpop.f32.mrb[0].mxu0
    %1749 = vmatprep.mubr.f32.mxu0 0.0
    %v1750 = vand.u32 %v1475, 4294901760
    %1751 = vmatmul.mubr.f32.gmra.mrb[0].mxu0 %v1750
    %v1752 = vpop.f32.mrb[0].mxu0
    %v1753 = vadd.f32 %v1576, %v1752
    %v1754 = vpop.f32.mrb[0].mxu0
    %1755 = vmatprep.mubr.f32.mxu0 0.0
    %v1756 = vand.u32 %v1476, 4294901760
    %1757 = vmatmul.mubr.f32.gmra.mrb[0].mxu0 %v1756
    %v1758 = vpop.f32.mrb[0].mxu0
    %v1759 = vadd.f32 %v1586, %v1758
    %v1760 = vpop.f32.mrb[0].mxu0
    %1761 = vmatprep.mubr.f32.mxu0 0.0
    %v1762 = vand.u32 %v1477, 4294901760
    %1763 = vmatmul.mubr.f32.gmra.mrb[0].mxu0 %v1762
    %v1764 = vpop.f32.mrb[0].mxu0
    %v1765 = vadd.f32 %v1596, %v1764
    %v1766 = vpop.f32.mrb[0].mxu0
    %1767 = vdwg.mxu0
    %1768 = vmatprep.subr.mxu0 0.0
    %v1769 = vand.u32 %v87, 4294901760
    %v1770 = vsub.f32 %v87, %v1769
    %1771 = vmatpush1.msra.mxu0 %v1770
    %1772 = vmatprep.subr.mxu0 0.0
    %v1773 = vand.u32 %v88, 4294901760
    %v1774 = vsub.f32 %v88, %v1773
    %1775 = vmatpush1.msra.mxu0 %v1774
    %1776 = vmatprep.subr.mxu0 0.0
    %v1777 = vand.u32 %v89, 4294901760
    %v1778 = vsub.f32 %v89, %v1777
    %1779 = vmatpush1.msra.mxu0 %v1778
    %1780 = vmatprep.subr.mxu0 0.0
    %v1781 = vand.u32 %v90, 4294901760
    %v1782 = vsub.f32 %v90, %v1781
    %1783 = vmatpush1.msra.mxu0 %v1782
    %1784 = vmatprep.subr.mxu0 0.0
    %v1785 = vand.u32 %v91, 4294901760
    %v1786 = vsub.f32 %v91, %v1785
    %1787 = vmatpush1.msra.mxu0 %v1786
    %1788 = vmatprep.subr.mxu0 0.0
    %v1789 = vand.u32 %v92, 4294901760
    %v1790 = vsub.f32 %v92, %v1789
    %1791 = vmatpush1.msra.mxu0 %v1790
    %1792 = vmatprep.subr.mxu0 0.0
    %v1793 = vand.u32 %v93, 4294901760
    %v1794 = vsub.f32 %v93, %v1793
    %1795 = vmatpush1.msra.mxu0 %v1794
    %1796 = vmatprep.subr.mxu0 0.0
    %v1797 = vand.u32 %v94, 4294901760
    %v1798 = vsub.f32 %v94, %v1797
    %1799 = vmatpush1.msra.mxu0 %v1798
    %1800 = vmatprep.subr.mxu0 0.0
    %v1801 = vand.u32 %v95, 4294901760
    %v1802 = vsub.f32 %v95, %v1801
    %1803 = vmatpush1.msra.mxu0 %v1802
    %1804 = vmatprep.subr.mxu0 0.0
    %v1805 = vand.u32 %v96, 4294901760
    %v1806 = vsub.f32 %v96, %v1805
    %1807 = vmatpush1.msra.mxu0 %v1806
    %1808 = vmatprep.subr.mxu0 0.0
    %v1809 = vand.u32 %v97, 4294901760
    %v1810 = vsub.f32 %v97, %v1809
    %1811 = vmatpush1.msra.mxu0 %v1810
    %1812 = vmatprep.subr.mxu0 0.0
    %v1813 = vand.u32 %v98, 4294901760
    %v1814 = vsub.f32 %v98, %v1813
    %1815 = vmatpush1.msra.mxu0 %v1814
    %1816 = vmatprep.subr.mxu0 0.0
    %v1817 = vand.u32 %v99, 4294901760
    %v1818 = vsub.f32 %v99, %v1817
    %1819 = vmatpush1.msra.mxu0 %v1818
    %1820 = vmatprep.subr.mxu0 0.0
    %v1821 = vand.u32 %v100, 4294901760
    %v1822 = vsub.f32 %v100, %v1821
    %1823 = vmatpush1.msra.mxu0 %v1822
    %1824 = vmatprep.subr.mxu0 0.0
    %v1825 = vand.u32 %v101, 4294901760
    %v1826 = vsub.f32 %v101, %v1825
    %1827 = vmatpush1.msra.mxu0 %v1826
    %1828 = vmatprep.subr.mxu0 0.0
    %v1829 = vand.u32 %v102, 4294901760
    %v1830 = vsub.f32 %v102, %v1829
    %1831 = vmatpush1.msra.mxu0 %v1830
    %1832 = vmatprep.subr.mxu0 0.0
    %1833 = vmatpush1.msra.mxu0 0.0
    %1834 = vmatprep.subr.mxu0 0.0
    %1835 = vmatpush1.msra.mxu0 0.0
    %1836 = vmatprep.subr.mxu0 0.0
    %1837 = vmatpush1.msra.mxu0 0.0
    %1838 = vmatprep.subr.mxu0 0.0
    %1839 = vmatpush1.msra.mxu0 0.0
    %1840 = vmatprep.subr.mxu0 0.0
    %1841 = vmatpush1.msra.mxu0 0.0
    %1842 = vmatprep.subr.mxu0 0.0
    %1843 = vmatpush1.msra.mxu0 0.0
    %1844 = vmatprep.subr.mxu0 0.0
    %1845 = vmatpush1.msra.mxu0 0.0
    %1846 = vmatprep.subr.mxu0 0.0
    %1847 = vmatpush1.msra.mxu0 0.0
    %1848 = vmatprep.subr.mxu0 0.0
    %1849 = vmatpush1.msra.mxu0 0.0
    %1850 = vmatprep.subr.mxu0 0.0
    %1851 = vmatpush1.msra.mxu0 0.0
    %1852 = vmatprep.subr.mxu0 0.0
    %1853 = vmatpush1.msra.mxu0 0.0
    %1854 = vmatprep.subr.mxu0 0.0
    %1855 = vmatpush1.msra.mxu0 0.0
    %1856 = vmatprep.subr.mxu0 0.0
    %1857 = vmatpush1.msra.mxu0 0.0
    %1858 = vmatprep.subr.mxu0 0.0
    %1859 = vmatpush1.msra.mxu0 0.0
    %1860 = vmatprep.subr.mxu0 0.0
    %1861 = vmatpush1.msra.mxu0 0.0
    %1862 = vmatprep.subr.mxu0 0.0
    %1863 = vmatpush1.msra.mxu0 0.0
    %1864 = vmatprep.mubr.f32.mxu0 0.0
    %v1865 = vand.u32 %v1474, 4294901760
    %v1866 = vsub.f32 %v1474, %v1865
    %1867 = vmatmul.mubr.f32.gmra.mrb[0].mxu0 %v1866
    %v1868 = vpop.f32.mrb[0].mxu0
    %v1869 = vadd.f32 %v1747, %v1868
    %v1870 = vpop.f32.mrb[0].mxu0
    %1871 = vmatprep.mubr.f32.mxu0 0.0
    %v1872 = vand.u32 %v1475, 4294901760
    %v1873 = vsub.f32 %v1475, %v1872
    %1874 = vmatmul.mubr.f32.gmra.mrb[0].mxu0 %v1873
    %v1875 = vpop.f32.mrb[0].mxu0
    %v1876 = vadd.f32 %v1753, %v1875
    %v1877 = vpop.f32.mrb[0].mxu0
    %1878 = vmatprep.mubr.f32.mxu0 0.0
    %v1879 = vand.u32 %v1476, 4294901760
    %v1880 = vsub.f32 %v1476, %v1879
    %1881 = vmatmul.mubr.f32.gmra.mrb[0].mxu0 %v1880
    %v1882 = vpop.f32.mrb[0].mxu0
    %v1883 = vadd.f32 %v1759, %v1882
    %v1884 = vpop.f32.mrb[0].mxu0
    %1885 = vmatprep.mubr.f32.mxu0 0.0
    %v1886 = vand.u32 %v1477, 4294901760
    %v1887 = vsub.f32 %v1477, %v1886
    %1888 = vmatmul.mubr.f32.gmra.mrb[0].mxu0 %v1887
    %v1889 = vpop.f32.mrb[0].mxu0
    %v1890 = vadd.f32 %v1765, %v1889
    %v1891 = vpop.f32.mrb[0].mxu0
    %1892 = vdwg.mxu0
    %1893 = vmatprep.subr.mxu0 0.0
    %v1894 = vand.u32 %v87, 4294901760
    %1895 = vmatpush1.msra.mxu0 %v1894
    %1896 = vmatprep.subr.mxu0 0.0
    %v1897 = vand.u32 %v88, 4294901760
    %1898 = vmatpush1.msra.mxu0 %v1897
    %1899 = vmatprep.subr.mxu0 0.0
    %v1900 = vand.u32 %v89, 4294901760
    %1901 = vmatpush1.msra.mxu0 %v1900
    %1902 = vmatprep.subr.mxu0 0.0
    %v1903 = vand.u32 %v90, 4294901760
    %1904 = vmatpush1.msra.mxu0 %v1903
    %1905 = vmatprep.subr.mxu0 0.0
    %v1906 = vand.u32 %v91, 4294901760
    %1907 = vmatpush1.msra.mxu0 %v1906
    %1908 = vmatprep.subr.mxu0 0.0
    %v1909 = vand.u32 %v92, 4294901760
    %1910 = vmatpush1.msra.mxu0 %v1909
    %1911 = vmatprep.subr.mxu0 0.0
    %v1912 = vand.u32 %v93, 4294901760
    %1913 = vmatpush1.msra.mxu0 %v1912
    %1914 = vmatprep.subr.mxu0 0.0
    %v1915 = vand.u32 %v94, 4294901760
    %1916 = vmatpush1.msra.mxu0 %v1915
    %1917 = vmatprep.subr.mxu0 0.0
    %v1918 = vand.u32 %v95, 4294901760
    %1919 = vmatpush1.msra.mxu0 %v1918
    %1920 = vmatprep.subr.mxu0 0.0
    %v1921 = vand.u32 %v96, 4294901760
    %1922 = vmatpush1.msra.mxu0 %v1921
    %1923 = vmatprep.subr.mxu0 0.0
    %v1924 = vand.u32 %v97, 4294901760
    %1925 = vmatpush1.msra.mxu0 %v1924
    %1926 = vmatprep.subr.mxu0 0.0
    %v1927 = vand.u32 %v98, 4294901760
    %1928 = vmatpush1.msra.mxu0 %v1927
    %1929 = vmatprep.subr.mxu0 0.0
    %v1930 = vand.u32 %v99, 4294901760
    %1931 = vmatpush1.msra.mxu0 %v1930
    %1932 = vmatprep.subr.mxu0 0.0
    %v1933 = vand.u32 %v100, 4294901760
    %1934 = vmatpush1.msra.mxu0 %v1933
    %1935 = vmatprep.subr.mxu0 0.0
    %v1936 = vand.u32 %v101, 4294901760
    %1937 = vmatpush1.msra.mxu0 %v1936
    %1938 = vmatprep.subr.mxu0 0.0
    %v1939 = vand.u32 %v102, 4294901760
    %1940 = vmatpush1.msra.mxu0 %v1939
    %1941 = vmatprep.subr.mxu0 0.0
    %1942 = vmatpush1.msra.mxu0 0.0
    %1943 = vmatprep.subr.mxu0 0.0
    %1944 = vmatpush1.msra.mxu0 0.0
    %1945 = vmatprep.subr.mxu0 0.0
    %1946 = vmatpush1.msra.mxu0 0.0
    %1947 = vmatprep.subr.mxu0 0.0
    %1948 = vmatpush1.msra.mxu0 0.0
    %1949 = vmatprep.subr.mxu0 0.0
    %1950 = vmatpush1.msra.mxu0 0.0
    %1951 = vmatprep.subr.mxu0 0.0
    %1952 = vmatpush1.msra.mxu0 0.0
    %1953 = vmatprep.subr.mxu0 0.0
    %1954 = vmatpush1.msra.mxu0 0.0
    %1955 = vmatprep.subr.mxu0 0.0
    %1956 = vmatpush1.msra.mxu0 0.0
    %1957 = vmatprep.subr.mxu0 0.0
    %1958 = vmatpush1.msra.mxu0 0.0
    %1959 = vmatprep.subr.mxu0 0.0
    %1960 = vmatpush1.msra.mxu0 0.0
    %1961 = vmatprep.subr.mxu0 0.0
    %1962 = vmatpush1.msra.mxu0 0.0
    %1963 = vmatprep.subr.mxu0 0.0
    %1964 = vmatpush1.msra.mxu0 0.0
    %1965 = vmatprep.subr.mxu0 0.0
    %1966 = vmatpush1.msra.mxu0 0.0
    %1967 = vmatprep.subr.mxu0 0.0
    %1968 = vmatpush1.msra.mxu0 0.0
    %1969 = vmatprep.subr.mxu0 0.0
    %1970 = vmatpush1.msra.mxu0 0.0
    %1971 = vmatprep.subr.mxu0 0.0
    %1972 = vmatpush1.msra.mxu0 0.0
    %1973 = vmatprep.mubr.f32.mxu0 0.0
    %v1974 = vand.u32 %v1474, 4294901760
    %v1975 = vsub.f32 %v1474, %v1974
    %v1976 = vand.u32 %v1975, 4294901760
    %1977 = vmatmul.mubr.f32.gmra.mrb[0].mxu0 %v1976
    %v1978 = vpop.f32.mrb[0].mxu0
    %v1979 = vadd.f32 %v1869, %v1978
    %v1980 = vpop.f32.mrb[0].mxu0
    %1981 = vmatprep.mubr.f32.mxu0 0.0
    %v1982 = vand.u32 %v1475, 4294901760
    %v1983 = vsub.f32 %v1475, %v1982
    %v1984 = vand.u32 %v1983, 4294901760
    %1985 = vmatmul.mubr.f32.gmra.mrb[0].mxu0 %v1984
    %v1986 = vpop.f32.mrb[0].mxu0
    %v1987 = vadd.f32 %v1876, %v1986
    %v1988 = vpop.f32.mrb[0].mxu0
    %1989 = vmatprep.mubr.f32.mxu0 0.0
    %v1990 = vand.u32 %v1476, 4294901760
    %v1991 = vsub.f32 %v1476, %v1990
    %v1992 = vand.u32 %v1991, 4294901760
    %1993 = vmatmul.mubr.f32.gmra.mrb[0].mxu0 %v1992
    %v1994 = vpop.f32.mrb[0].mxu0
    %v1995 = vadd.f32 %v1883, %v1994
    %v1996 = vpop.f32.mrb[0].mxu0
    %1997 = vmatprep.mubr.f32.mxu0 0.0
    %v1998 = vand.u32 %v1477, 4294901760
    %v1999 = vsub.f32 %v1477, %v1998
    %v2000 = vand.u32 %v1999, 4294901760
    %2001 = vmatmul.mubr.f32.gmra.mrb[0].mxu0 %v2000
    %v2002 = vpop.f32.mrb[0].mxu0
    %v2003 = vadd.f32 %v1890, %v2002
    %v2004 = vpop.f32.mrb[0].mxu0
    %2005 = vdwg.mxu0
    %2006 = vmatprep.subr.mxu0 0.0
    %v2007 = vand.u32 %v87, 4294901760
    %v2008 = vsub.f32 %v87, %v2007
    %v2009 = vand.u32 %v2008, 4294901760
    %2010 = vmatpush1.msra.mxu0 %v2009
    %2011 = vmatprep.subr.mxu0 0.0
    %v2012 = vand.u32 %v88, 4294901760
    %v2013 = vsub.f32 %v88, %v2012
    %v2014 = vand.u32 %v2013, 4294901760
    %2015 = vmatpush1.msra.mxu0 %v2014
    %2016 = vmatprep.subr.mxu0 0.0
    %v2017 = vand.u32 %v89, 4294901760
    %v2018 = vsub.f32 %v89, %v2017
    %v2019 = vand.u32 %v2018, 4294901760
    %2020 = vmatpush1.msra.mxu0 %v2019
    %2021 = vmatprep.subr.mxu0 0.0
    %v2022 = vand.u32 %v90, 4294901760
    %v2023 = vsub.f32 %v90, %v2022
    %v2024 = vand.u32 %v2023, 4294901760
    %2025 = vmatpush1.msra.mxu0 %v2024
    %2026 = vmatprep.subr.mxu0 0.0
    %v2027 = vand.u32 %v91, 4294901760
    %v2028 = vsub.f32 %v91, %v2027
    %v2029 = vand.u32 %v2028, 4294901760
    %2030 = vmatpush1.msra.mxu0 %v2029
    %2031 = vmatprep.subr.mxu0 0.0
    %v2032 = vand.u32 %v92, 4294901760
    %v2033 = vsub.f32 %v92, %v2032
    %v2034 = vand.u32 %v2033, 4294901760
    %2035 = vmatpush1.msra.mxu0 %v2034
    %2036 = vmatprep.subr.mxu0 0.0
    %v2037 = vand.u32 %v93, 4294901760
    %v2038 = vsub.f32 %v93, %v2037
    %v2039 = vand.u32 %v2038, 4294901760
    %2040 = vmatpush1.msra.mxu0 %v2039
    %2041 = vmatprep.subr.mxu0 0.0
    %v2042 = vand.u32 %v94, 4294901760
    %v2043 = vsub.f32 %v94, %v2042
    %v2044 = vand.u32 %v2043, 4294901760
    %2045 = vmatpush1.msra.mxu0 %v2044
    %2046 = vmatprep.subr.mxu0 0.0
    %v2047 = vand.u32 %v95, 4294901760
    %v2048 = vsub.f32 %v95, %v2047
    %v2049 = vand.u32 %v2048, 4294901760
    %2050 = vmatpush1.msra.mxu0 %v2049
    %2051 = vmatprep.subr.mxu0 0.0
    %v2052 = vand.u32 %v96, 4294901760
    %v2053 = vsub.f32 %v96, %v2052
    %v2054 = vand.u32 %v2053, 4294901760
    %2055 = vmatpush1.msra.mxu0 %v2054
    %2056 = vmatprep.subr.mxu0 0.0
    %v2057 = vand.u32 %v97, 4294901760
    %v2058 = vsub.f32 %v97, %v2057
    %v2059 = vand.u32 %v2058, 4294901760
    %2060 = vmatpush1.msra.mxu0 %v2059
    %2061 = vmatprep.subr.mxu0 0.0
    %v2062 = vand.u32 %v98, 4294901760
    %v2063 = vsub.f32 %v98, %v2062
    %v2064 = vand.u32 %v2063, 4294901760
    %2065 = vmatpush1.msra.mxu0 %v2064
    %2066 = vmatprep.subr.mxu0 0.0
    %v2067 = vand.u32 %v99, 4294901760
    %v2068 = vsub.f32 %v99, %v2067
    %v2069 = vand.u32 %v2068, 4294901760
    %2070 = vmatpush1.msra.mxu0 %v2069
    %2071 = vmatprep.subr.mxu0 0.0
    %v2072 = vand.u32 %v100, 4294901760
    %v2073 = vsub.f32 %v100, %v2072
    %v2074 = vand.u32 %v2073, 4294901760
    %2075 = vmatpush1.msra.mxu0 %v2074
    %2076 = vmatprep.subr.mxu0 0.0
    %v2077 = vand.u32 %v101, 4294901760
    %v2078 = vsub.f32 %v101, %v2077
    %v2079 = vand.u32 %v2078, 4294901760
    %2080 = vmatpush1.msra.mxu0 %v2079
    %2081 = vmatprep.subr.mxu0 0.0
    %v2082 = vand.u32 %v102, 4294901760
    %v2083 = vsub.f32 %v102, %v2082
    %v2084 = vand.u32 %v2083, 4294901760
    %2085 = vmatpush1.msra.mxu0 %v2084
    %2086 = vmatprep.subr.mxu0 0.0
    %2087 = vmatpush1.msra.mxu0 0.0
    %2088 = vmatprep.subr.mxu0 0.0
    %2089 = vmatpush1.msra.mxu0 0.0
    %2090 = vmatprep.subr.mxu0 0.0
    %2091 = vmatpush1.msra.mxu0 0.0
    %2092 = vmatprep.subr.mxu0 0.0
    %2093 = vmatpush1.msra.mxu0 0.0
    %2094 = vmatprep.subr.mxu0 0.0
    %2095 = vmatpush1.msra.mxu0 0.0
    %2096 = vmatprep.subr.mxu0 0.0
    %2097 = vmatpush1.msra.mxu0 0.0
    %2098 = vmatprep.subr.mxu0 0.0
    %2099 = vmatpush1.msra.mxu0 0.0
    %2100 = vmatprep.subr.mxu0 0.0
    %2101 = vmatpush1.msra.mxu0 0.0
    %2102 = vmatprep.subr.mxu0 0.0
    %2103 = vmatpush1.msra.mxu0 0.0
    %2104 = vmatprep.subr.mxu0 0.0
    %2105 = vmatpush1.msra.mxu0 0.0
    %2106 = vmatprep.subr.mxu0 0.0
    %2107 = vmatpush1.msra.mxu0 0.0
    %2108 = vmatprep.subr.mxu0 0.0
    %2109 = vmatpush1.msra.mxu0 0.0
    %2110 = vmatprep.subr.mxu0 0.0
    %2111 = vmatpush1.msra.mxu0 0.0
    %2112 = vmatprep.subr.mxu0 0.0
    %2113 = vmatpush1.msra.mxu0 0.0
    %2114 = vmatprep.subr.mxu0 0.0
    %2115 = vmatpush1.msra.mxu0 0.0
    %2116 = vmatprep.subr.mxu0 0.0
    %2117 = vmatpush1.msra.mxu0 0.0
    %2118 = vmatprep.mubr.f32.mxu0 0.0
    %v2119 = vand.u32 %v1474, 4294901760
    %2120 = vmatmul.mubr.f32.gmra.mrb[0].mxu0 %v2119
    %v2121 = vpop.f32.mrb[0].mxu0
    %v2122 = vadd.f32 %v1979, %v2121
    %v2123 = vpop.f32.mrb[0].mxu0
    %2124 = vmatprep.mubr.f32.mxu0 0.0
    %v2125 = vand.u32 %v1475, 4294901760
    %2126 = vmatmul.mubr.f32.gmra.mrb[0].mxu0 %v2125
    %v2127 = vpop.f32.mrb[0].mxu0
    %v2128 = vadd.f32 %v1987, %v2127
    %v2129 = vpop.f32.mrb[0].mxu0
    %2130 = vmatprep.mubr.f32.mxu0 0.0
    %v2131 = vand.u32 %v1476, 4294901760
    %2132 = vmatmul.mubr.f32.gmra.mrb[0].mxu0 %v2131
    %v2133 = vpop.f32.mrb[0].mxu0
    %v2134 = vadd.f32 %v1995, %v2133
    %v2135 = vpop.f32.mrb[0].mxu0
    %2136 = vmatprep.mubr.f32.mxu0 0.0
    %v2137 = vand.u32 %v1477, 4294901760
    %2138 = vmatmul.mubr.f32.gmra.mrb[0].mxu0 %v2137
    %v2139 = vpop.f32.mrb[0].mxu0
    %v2140 = vadd.f32 %v2003, %v2139
    %v2141 = vpop.f32.mrb[0].mxu0
    %2142 = vdwg.mxu0
    %2143 = vmatprep.subr.mxu0 0.0
    %v2144 = vand.u32 %v87, 4294901760
    %2145 = vmatpush1.msra.mxu0 %v2144
    %2146 = vmatprep.subr.mxu0 0.0
    %v2147 = vand.u32 %v88, 4294901760
    %2148 = vmatpush1.msra.mxu0 %v2147
    %2149 = vmatprep.subr.mxu0 0.0
    %v2150 = vand.u32 %v89, 4294901760
    %2151 = vmatpush1.msra.mxu0 %v2150
    %2152 = vmatprep.subr.mxu0 0.0
    %v2153 = vand.u32 %v90, 4294901760
    %2154 = vmatpush1.msra.mxu0 %v2153
    %2155 = vmatprep.subr.mxu0 0.0
    %v2156 = vand.u32 %v91, 4294901760
    %2157 = vmatpush1.msra.mxu0 %v2156
    %2158 = vmatprep.subr.mxu0 0.0
    %v2159 = vand.u32 %v92, 4294901760
    %2160 = vmatpush1.msra.mxu0 %v2159
    %2161 = vmatprep.subr.mxu0 0.0
    %v2162 = vand.u32 %v93, 4294901760
    %2163 = vmatpush1.msra.mxu0 %v2162
    %2164 = vmatprep.subr.mxu0 0.0
    %v2165 = vand.u32 %v94, 4294901760
    %2166 = vmatpush1.msra.mxu0 %v2165
    %2167 = vmatprep.subr.mxu0 0.0
    %v2168 = vand.u32 %v95, 4294901760
    %2169 = vmatpush1.msra.mxu0 %v2168
    %2170 = vmatprep.subr.mxu0 0.0
    %v2171 = vand.u32 %v96, 4294901760
    %2172 = vmatpush1.msra.mxu0 %v2171
    %2173 = vmatprep.subr.mxu0 0.0
    %v2174 = vand.u32 %v97, 4294901760
    %2175 = vmatpush1.msra.mxu0 %v2174
    %2176 = vmatprep.subr.mxu0 0.0
    %v2177 = vand.u32 %v98, 4294901760
    %2178 = vmatpush1.msra.mxu0 %v2177
    %2179 = vmatprep.subr.mxu0 0.0
    %v2180 = vand.u32 %v99, 4294901760
    %2181 = vmatpush1.msra.mxu0 %v2180
    %2182 = vmatprep.subr.mxu0 0.0
    %v2183 = vand.u32 %v100, 4294901760
    %2184 = vmatpush1.msra.mxu0 %v2183
    %2185 = vmatprep.subr.mxu0 0.0
    %v2186 = vand.u32 %v101, 4294901760
    %2187 = vmatpush1.msra.mxu0 %v2186
    %2188 = vmatprep.subr.mxu0 0.0
    %v2189 = vand.u32 %v102, 4294901760
    %2190 = vmatpush1.msra.mxu0 %v2189
    %2191 = vmatprep.subr.mxu0 0.0
    %2192 = vmatpush1.msra.mxu0 0.0
    %2193 = vmatprep.subr.mxu0 0.0
    %2194 = vmatpush1.msra.mxu0 0.0
    %2195 = vmatprep.subr.mxu0 0.0
    %2196 = vmatpush1.msra.mxu0 0.0
    %2197 = vmatprep.subr.mxu0 0.0
    %2198 = vmatpush1.msra.mxu0 0.0
    %2199 = vmatprep.subr.mxu0 0.0
    %2200 = vmatpush1.msra.mxu0 0.0
    %2201 = vmatprep.subr.mxu0 0.0
    %2202 = vmatpush1.msra.mxu0 0.0
    %2203 = vmatprep.subr.mxu0 0.0
    %2204 = vmatpush1.msra.mxu0 0.0
    %2205 = vmatprep.subr.mxu0 0.0
    %2206 = vmatpush1.msra.mxu0 0.0
    %2207 = vmatprep.subr.mxu0 0.0
    %2208 = vmatpush1.msra.mxu0 0.0
    %2209 = vmatprep.subr.mxu0 0.0
    %2210 = vmatpush1.msra.mxu0 0.0
    %2211 = vmatprep.subr.mxu0 0.0
    %2212 = vmatpush1.msra.mxu0 0.0
    %2213 = vmatprep.subr.mxu0 0.0
    %2214 = vmatpush1.msra.mxu0 0.0
    %2215 = vmatprep.subr.mxu0 0.0
    %2216 = vmatpush1.msra.mxu0 0.0
    %2217 = vmatprep.subr.mxu0 0.0
    %2218 = vmatpush1.msra.mxu0 0.0
    %2219 = vmatprep.subr.mxu0 0.0
    %2220 = vmatpush1.msra.mxu0 0.0
    %2221 = vmatprep.subr.mxu0 0.0
    %2222 = vmatpush1.msra.mxu0 0.0
    %2223 = vmatprep.mubr.f32.mxu0 0.0
    %v2224 = vand.u32 %v1474, 4294901760
    %2225 = vmatmul.mubr.f32.gmra.mrb[0].mxu0 %v2224
    %v2226 = vpop.f32.mrb[0].mxu0
    %v2227 = vadd.f32 %v2122, %v2226
    %v2228 = vpop.f32.mrb[0].mxu0
    %2229 = vmatprep.mubr.f32.mxu0 0.0
    %v2230 = vand.u32 %v1475, 4294901760
    %2231 = vmatmul.mubr.f32.gmra.mrb[0].mxu0 %v2230
    %v2232 = vpop.f32.mrb[0].mxu0
    %v2233 = vadd.f32 %v2128, %v2232
    %v2234 = vpop.f32.mrb[0].mxu0
    %2235 = vmatprep.mubr.f32.mxu0 0.0
    %v2236 = vand.u32 %v1476, 4294901760
    %2237 = vmatmul.mubr.f32.gmra.mrb[0].mxu0 %v2236
    %v2238 = vpop.f32.mrb[0].mxu0
    %v2239 = vadd.f32 %v2134, %v2238
    %v2240 = vpop.f32.mrb[0].mxu0
    %2241 = vmatprep.mubr.f32.mxu0 0.0
    %v2242 = vand.u32 %v1477, 4294901760
    %2243 = vmatmul.mubr.f32.gmra.mrb[0].mxu0 %v2242
    %v2244 = vpop.f32.mrb[0].mxu0
    %v2245 = vadd.f32 %v2140, %v2244
    %v2246 = vpop.f32.mrb[0].mxu0
    %2247 = vdwg.mxu0
    %v2248 = vmul.f32 %v2227, 0.03125
    %v2249 = vmul.f32 %v2233, 0.03125
    %v2250 = vmul.f32 %v2239, 0.03125
    %v2251 = vmul.f32 %v2245, 0.03125
    %v2252 = vadd.f32 %v2248, 1e-06
    %v2253 = vadd.f32 %v2249, 1e-06
    %v2254 = vadd.f32 %v2250, 1e-06
    %v2255 = vadd.f32 %v2251, 1e-06
    %v2256 = vrsqrt.pop %v2252
    %v2257 = vrsqrt.pop %v2253
    %v2258 = vrsqrt.pop %v2254
    %v2259 = vrsqrt.pop %v2255
    %v2261 = vsel %vm878, %v2256, 0
    %v2264 = vsel %vm878, %v2257, 0
    %v2267 = vsel %vm878, %v2258, 0
    %v2270 = vsel %vm878, %v2259, 0
    %2272 = vmatprep.subr.mxu0 0.0
    %v2273 = vand.u32 %v893, 4294901760
    %2274 = vmatpush1.msra.mxu0 %v2273
    %2275 = vmatprep.subr.mxu0 0.0
    %2276 = vmatpush1.msra.mxu0 0.0
    %2277 = vmatprep.subr.mxu0 0.0
    %2278 = vmatpush1.msra.mxu0 0.0
    %2279 = vmatprep.subr.mxu0 0.0
    %2280 = vmatpush1.msra.mxu0 0.0
    %2281 = vmatprep.subr.mxu0 0.0
    %2282 = vmatpush1.msra.mxu0 0.0
    %2283 = vmatprep.subr.mxu0 0.0
    %2284 = vmatpush1.msra.mxu0 0.0
    %2285 = vmatprep.subr.mxu0 0.0
    %2286 = vmatpush1.msra.mxu0 0.0
    %2287 = vmatprep.subr.mxu0 0.0
    %2288 = vmatpush1.msra.mxu0 0.0
    %2289 = vmatprep.subr.mxu0 0.0
    %2290 = vmatpush1.msra.mxu0 0.0
    %2291 = vmatprep.subr.mxu0 0.0
    %2292 = vmatpush1.msra.mxu0 0.0
    %2293 = vmatprep.subr.mxu0 0.0
    %2294 = vmatpush1.msra.mxu0 0.0
    %2295 = vmatprep.subr.mxu0 0.0
    %2296 = vmatpush1.msra.mxu0 0.0
    %2297 = vmatprep.subr.mxu0 0.0
    %2298 = vmatpush1.msra.mxu0 0.0
    %2299 = vmatprep.subr.mxu0 0.0
    %2300 = vmatpush1.msra.mxu0 0.0
    %2301 = vmatprep.subr.mxu0 0.0
    %2302 = vmatpush1.msra.mxu0 0.0
    %2303 = vmatprep.subr.mxu0 0.0
    %2304 = vmatpush1.msra.mxu0 0.0
    %2305 = vmatprep.subr.mxu0 0.0
    %2306 = vmatpush1.msra.mxu0 0.0
    %2307 = vmatprep.subr.mxu0 0.0
    %2308 = vmatpush1.msra.mxu0 0.0
    %2309 = vmatprep.subr.mxu0 0.0
    %2310 = vmatpush1.msra.mxu0 0.0
    %2311 = vmatprep.subr.mxu0 0.0
    %2312 = vmatpush1.msra.mxu0 0.0
    %2313 = vmatprep.subr.mxu0 0.0
    %2314 = vmatpush1.msra.mxu0 0.0
    %2315 = vmatprep.subr.mxu0 0.0
    %2316 = vmatpush1.msra.mxu0 0.0
    %2317 = vmatprep.subr.mxu0 0.0
    %2318 = vmatpush1.msra.mxu0 0.0
    %2319 = vmatprep.subr.mxu0 0.0
    %2320 = vmatpush1.msra.mxu0 0.0
    %2321 = vmatprep.subr.mxu0 0.0
    %2322 = vmatpush1.msra.mxu0 0.0
    %2323 = vmatprep.subr.mxu0 0.0
    %2324 = vmatpush1.msra.mxu0 0.0
    %2325 = vmatprep.subr.mxu0 0.0
    %2326 = vmatpush1.msra.mxu0 0.0
    %2327 = vmatprep.subr.mxu0 0.0
    %2328 = vmatpush1.msra.mxu0 0.0
    %2329 = vmatprep.subr.mxu0 0.0
    %2330 = vmatpush1.msra.mxu0 0.0
    %2331 = vmatprep.subr.mxu0 0.0
    %2332 = vmatpush1.msra.mxu0 0.0
    %2333 = vmatprep.subr.mxu0 0.0
    %2334 = vmatpush1.msra.mxu0 0.0
    %2335 = vmatprep.subr.mxu0 0.0
    %2336 = vmatpush1.msra.mxu0 0.0
    %2337 = vmatprep.mubr.f32.mxu0 0.0
    %v2338 = vand.u32 %v2261, 4294901760
    %v2339 = vsub.f32 %v2261, %v2338
    %v2340 = vand.u32 %v2339, 4294901760
    %v2341 = vsub.f32 %v2339, %v2340
    %v2342 = vand.u32 %v2341, 4294901760
    %2343 = vmatmul.mubr.f32.gmra.mrb[0].mxu0 %v2342
    %v2344 = vpop.f32.mrb[0].mxu0
    %v2345 = vadd.f32 0.0, %v2344
    %v2346 = vpop.f32.mrb[0].mxu0
    %2347 = vmatprep.mubr.f32.mxu0 0.0
    %v2348 = vand.u32 %v2264, 4294901760
    %v2349 = vsub.f32 %v2264, %v2348
    %v2350 = vand.u32 %v2349, 4294901760
    %v2351 = vsub.f32 %v2349, %v2350
    %v2352 = vand.u32 %v2351, 4294901760
    %2353 = vmatmul.mubr.f32.gmra.mrb[0].mxu0 %v2352
    %v2354 = vpop.f32.mrb[0].mxu0
    %v2355 = vadd.f32 0.0, %v2354
    %v2356 = vpop.f32.mrb[0].mxu0
    %2357 = vmatprep.mubr.f32.mxu0 0.0
    %v2358 = vand.u32 %v2267, 4294901760
    %v2359 = vsub.f32 %v2267, %v2358
    %v2360 = vand.u32 %v2359, 4294901760
    %v2361 = vsub.f32 %v2359, %v2360
    %v2362 = vand.u32 %v2361, 4294901760
    %2363 = vmatmul.mubr.f32.gmra.mrb[0].mxu0 %v2362
    %v2364 = vpop.f32.mrb[0].mxu0
    %v2365 = vadd.f32 0.0, %v2364
    %v2366 = vpop.f32.mrb[0].mxu0
    %2367 = vmatprep.mubr.f32.mxu0 0.0
    %v2368 = vand.u32 %v2270, 4294901760
    %v2369 = vsub.f32 %v2270, %v2368
    %v2370 = vand.u32 %v2369, 4294901760
    %v2371 = vsub.f32 %v2369, %v2370
    %v2372 = vand.u32 %v2371, 4294901760
    %2373 = vmatmul.mubr.f32.gmra.mrb[0].mxu0 %v2372
    %v2374 = vpop.f32.mrb[0].mxu0
    %v2375 = vadd.f32 0.0, %v2374
    %v2376 = vpop.f32.mrb[0].mxu0
    %2377 = vdwg.mxu0
    %2378 = vmatprep.subr.mxu0 0.0
    %v2379 = vand.u32 %v893, 4294901760
    %v2380 = vsub.f32 %v893, %v2379
    %v2381 = vand.u32 %v2380, 4294901760
    %v2382 = vsub.f32 %v2380, %v2381
    %v2383 = vand.u32 %v2382, 4294901760
    %2384 = vmatpush1.msra.mxu0 %v2383
    %2385 = vmatprep.subr.mxu0 0.0
    %2386 = vmatpush1.msra.mxu0 0.0
    %2387 = vmatprep.subr.mxu0 0.0
    %2388 = vmatpush1.msra.mxu0 0.0
    %2389 = vmatprep.subr.mxu0 0.0
    %2390 = vmatpush1.msra.mxu0 0.0
    %2391 = vmatprep.subr.mxu0 0.0
    %2392 = vmatpush1.msra.mxu0 0.0
    %2393 = vmatprep.subr.mxu0 0.0
    %2394 = vmatpush1.msra.mxu0 0.0
    %2395 = vmatprep.subr.mxu0 0.0
    %2396 = vmatpush1.msra.mxu0 0.0
    %2397 = vmatprep.subr.mxu0 0.0
    %2398 = vmatpush1.msra.mxu0 0.0
    %2399 = vmatprep.subr.mxu0 0.0
    %2400 = vmatpush1.msra.mxu0 0.0
    %2401 = vmatprep.subr.mxu0 0.0
    %2402 = vmatpush1.msra.mxu0 0.0
    %2403 = vmatprep.subr.mxu0 0.0
    %2404 = vmatpush1.msra.mxu0 0.0
    %2405 = vmatprep.subr.mxu0 0.0
    %2406 = vmatpush1.msra.mxu0 0.0
    %2407 = vmatprep.subr.mxu0 0.0
    %2408 = vmatpush1.msra.mxu0 0.0
    %2409 = vmatprep.subr.mxu0 0.0
    %2410 = vmatpush1.msra.mxu0 0.0
    %2411 = vmatprep.subr.mxu0 0.0
    %2412 = vmatpush1.msra.mxu0 0.0
    %2413 = vmatprep.subr.mxu0 0.0
    %2414 = vmatpush1.msra.mxu0 0.0
    %2415 = vmatprep.subr.mxu0 0.0
    %2416 = vmatpush1.msra.mxu0 0.0
    %2417 = vmatprep.subr.mxu0 0.0
    %2418 = vmatpush1.msra.mxu0 0.0
    %2419 = vmatprep.subr.mxu0 0.0
    %2420 = vmatpush1.msra.mxu0 0.0
    %2421 = vmatprep.subr.mxu0 0.0
    %2422 = vmatpush1.msra.mxu0 0.0
    %2423 = vmatprep.subr.mxu0 0.0
    %2424 = vmatpush1.msra.mxu0 0.0
    %2425 = vmatprep.subr.mxu0 0.0
    %2426 = vmatpush1.msra.mxu0 0.0
    %2427 = vmatprep.subr.mxu0 0.0
    %2428 = vmatpush1.msra.mxu0 0.0
    %2429 = vmatprep.subr.mxu0 0.0
    %2430 = vmatpush1.msra.mxu0 0.0
    %2431 = vmatprep.subr.mxu0 0.0
    %2432 = vmatpush1.msra.mxu0 0.0
    %2433 = vmatprep.subr.mxu0 0.0
    %2434 = vmatpush1.msra.mxu0 0.0
    %2435 = vmatprep.subr.mxu0 0.0
    %2436 = vmatpush1.msra.mxu0 0.0
    %2437 = vmatprep.subr.mxu0 0.0
    %2438 = vmatpush1.msra.mxu0 0.0
    %2439 = vmatprep.subr.mxu0 0.0
    %2440 = vmatpush1.msra.mxu0 0.0
    %2441 = vmatprep.subr.mxu0 0.0
    %2442 = vmatpush1.msra.mxu0 0.0
    %2443 = vmatprep.subr.mxu0 0.0
    %2444 = vmatpush1.msra.mxu0 0.0
    %2445 = vmatprep.subr.mxu0 0.0
    %2446 = vmatpush1.msra.mxu0 0.0
    %2447 = vmatprep.mubr.f32.mxu0 0.0
    %v2448 = vand.u32 %v2261, 4294901760
    %2449 = vmatmul.mubr.f32.gmra.mrb[0].mxu0 %v2448
    %v2450 = vpop.f32.mrb[0].mxu0
    %v2451 = vadd.f32 %v2345, %v2450
    %v2452 = vpop.f32.mrb[0].mxu0
    %2453 = vmatprep.mubr.f32.mxu0 0.0
    %v2454 = vand.u32 %v2264, 4294901760
    %2455 = vmatmul.mubr.f32.gmra.mrb[0].mxu0 %v2454
    %v2456 = vpop.f32.mrb[0].mxu0
    %v2457 = vadd.f32 %v2355, %v2456
    %v2458 = vpop.f32.mrb[0].mxu0
    %2459 = vmatprep.mubr.f32.mxu0 0.0
    %v2460 = vand.u32 %v2267, 4294901760
    %2461 = vmatmul.mubr.f32.gmra.mrb[0].mxu0 %v2460
    %v2462 = vpop.f32.mrb[0].mxu0
    %v2463 = vadd.f32 %v2365, %v2462
    %v2464 = vpop.f32.mrb[0].mxu0
    %2465 = vmatprep.mubr.f32.mxu0 0.0
    %v2466 = vand.u32 %v2270, 4294901760
    %2467 = vmatmul.mubr.f32.gmra.mrb[0].mxu0 %v2466
    %v2468 = vpop.f32.mrb[0].mxu0
    %v2469 = vadd.f32 %v2375, %v2468
    %v2470 = vpop.f32.mrb[0].mxu0
    %2471 = vdwg.mxu0
    %2472 = vmatprep.subr.mxu0 0.0
    %v2473 = vand.u32 %v893, 4294901760
    %v2474 = vsub.f32 %v893, %v2473
    %2475 = vmatpush1.msra.mxu0 %v2474
    %2476 = vmatprep.subr.mxu0 0.0
    %2477 = vmatpush1.msra.mxu0 0.0
    %2478 = vmatprep.subr.mxu0 0.0
    %2479 = vmatpush1.msra.mxu0 0.0
    %2480 = vmatprep.subr.mxu0 0.0
    %2481 = vmatpush1.msra.mxu0 0.0
    %2482 = vmatprep.subr.mxu0 0.0
    %2483 = vmatpush1.msra.mxu0 0.0
    %2484 = vmatprep.subr.mxu0 0.0
    %2485 = vmatpush1.msra.mxu0 0.0
    %2486 = vmatprep.subr.mxu0 0.0
    %2487 = vmatpush1.msra.mxu0 0.0
    %2488 = vmatprep.subr.mxu0 0.0
    %2489 = vmatpush1.msra.mxu0 0.0
    %2490 = vmatprep.subr.mxu0 0.0
    %2491 = vmatpush1.msra.mxu0 0.0
    %2492 = vmatprep.subr.mxu0 0.0
    %2493 = vmatpush1.msra.mxu0 0.0
    %2494 = vmatprep.subr.mxu0 0.0
    %2495 = vmatpush1.msra.mxu0 0.0
    %2496 = vmatprep.subr.mxu0 0.0
    %2497 = vmatpush1.msra.mxu0 0.0
    %2498 = vmatprep.subr.mxu0 0.0
    %2499 = vmatpush1.msra.mxu0 0.0
    %2500 = vmatprep.subr.mxu0 0.0
    %2501 = vmatpush1.msra.mxu0 0.0
    %2502 = vmatprep.subr.mxu0 0.0
    %2503 = vmatpush1.msra.mxu0 0.0
    %2504 = vmatprep.subr.mxu0 0.0
    %2505 = vmatpush1.msra.mxu0 0.0
    %2506 = vmatprep.subr.mxu0 0.0
    %2507 = vmatpush1.msra.mxu0 0.0
    %2508 = vmatprep.subr.mxu0 0.0
    %2509 = vmatpush1.msra.mxu0 0.0
    %2510 = vmatprep.subr.mxu0 0.0
    %2511 = vmatpush1.msra.mxu0 0.0
    %2512 = vmatprep.subr.mxu0 0.0
    %2513 = vmatpush1.msra.mxu0 0.0
    %2514 = vmatprep.subr.mxu0 0.0
    %2515 = vmatpush1.msra.mxu0 0.0
    %2516 = vmatprep.subr.mxu0 0.0
    %2517 = vmatpush1.msra.mxu0 0.0
    %2518 = vmatprep.subr.mxu0 0.0
    %2519 = vmatpush1.msra.mxu0 0.0
    %2520 = vmatprep.subr.mxu0 0.0
    %2521 = vmatpush1.msra.mxu0 0.0
    %2522 = vmatprep.subr.mxu0 0.0
    %2523 = vmatpush1.msra.mxu0 0.0
    %2524 = vmatprep.subr.mxu0 0.0
    %2525 = vmatpush1.msra.mxu0 0.0
    %2526 = vmatprep.subr.mxu0 0.0
    %2527 = vmatpush1.msra.mxu0 0.0
    %2528 = vmatprep.subr.mxu0 0.0
    %2529 = vmatpush1.msra.mxu0 0.0
    %2530 = vmatprep.subr.mxu0 0.0
    %2531 = vmatpush1.msra.mxu0 0.0
    %2532 = vmatprep.subr.mxu0 0.0
    %2533 = vmatpush1.msra.mxu0 0.0
    %2534 = vmatprep.subr.mxu0 0.0
    %2535 = vmatpush1.msra.mxu0 0.0
    %2536 = vmatprep.subr.mxu0 0.0
    %2537 = vmatpush1.msra.mxu0 0.0
    %2538 = vmatprep.mubr.f32.mxu0 0.0
    %v2539 = vand.u32 %v2261, 4294901760
    %v2540 = vsub.f32 %v2261, %v2539
    %2541 = vmatmul.mubr.f32.gmra.mrb[0].mxu0 %v2540
    %v2542 = vpop.f32.mrb[0].mxu0
    %v2543 = vadd.f32 %v2451, %v2542
    %v2544 = vpop.f32.mrb[0].mxu0
    %2545 = vmatprep.mubr.f32.mxu0 0.0
    %v2546 = vand.u32 %v2264, 4294901760
    %v2547 = vsub.f32 %v2264, %v2546
    %2548 = vmatmul.mubr.f32.gmra.mrb[0].mxu0 %v2547
    %v2549 = vpop.f32.mrb[0].mxu0
    %v2550 = vadd.f32 %v2457, %v2549
    %v2551 = vpop.f32.mrb[0].mxu0
    %2552 = vmatprep.mubr.f32.mxu0 0.0
    %v2553 = vand.u32 %v2267, 4294901760
    %v2554 = vsub.f32 %v2267, %v2553
    %2555 = vmatmul.mubr.f32.gmra.mrb[0].mxu0 %v2554
    %v2556 = vpop.f32.mrb[0].mxu0
    %v2557 = vadd.f32 %v2463, %v2556
    %v2558 = vpop.f32.mrb[0].mxu0
    %2559 = vmatprep.mubr.f32.mxu0 0.0
    %v2560 = vand.u32 %v2270, 4294901760
    %v2561 = vsub.f32 %v2270, %v2560
    %2562 = vmatmul.mubr.f32.gmra.mrb[0].mxu0 %v2561
    %v2563 = vpop.f32.mrb[0].mxu0
    %v2564 = vadd.f32 %v2469, %v2563
    %v2565 = vpop.f32.mrb[0].mxu0
    %2566 = vdwg.mxu0
    %2567 = vmatprep.subr.mxu0 0.0
    %v2568 = vand.u32 %v893, 4294901760
    %2569 = vmatpush1.msra.mxu0 %v2568
    %2570 = vmatprep.subr.mxu0 0.0
    %2571 = vmatpush1.msra.mxu0 0.0
    %2572 = vmatprep.subr.mxu0 0.0
    %2573 = vmatpush1.msra.mxu0 0.0
    %2574 = vmatprep.subr.mxu0 0.0
    %2575 = vmatpush1.msra.mxu0 0.0
    %2576 = vmatprep.subr.mxu0 0.0
    %2577 = vmatpush1.msra.mxu0 0.0
    %2578 = vmatprep.subr.mxu0 0.0
    %2579 = vmatpush1.msra.mxu0 0.0
    %2580 = vmatprep.subr.mxu0 0.0
    %2581 = vmatpush1.msra.mxu0 0.0
    %2582 = vmatprep.subr.mxu0 0.0
    %2583 = vmatpush1.msra.mxu0 0.0
    %2584 = vmatprep.subr.mxu0 0.0
    %2585 = vmatpush1.msra.mxu0 0.0
    %2586 = vmatprep.subr.mxu0 0.0
    %2587 = vmatpush1.msra.mxu0 0.0
    %2588 = vmatprep.subr.mxu0 0.0
    %2589 = vmatpush1.msra.mxu0 0.0
    %2590 = vmatprep.subr.mxu0 0.0
    %2591 = vmatpush1.msra.mxu0 0.0
    %2592 = vmatprep.subr.mxu0 0.0
    %2593 = vmatpush1.msra.mxu0 0.0
    %2594 = vmatprep.subr.mxu0 0.0
    %2595 = vmatpush1.msra.mxu0 0.0
    %2596 = vmatprep.subr.mxu0 0.0
    %2597 = vmatpush1.msra.mxu0 0.0
    %2598 = vmatprep.subr.mxu0 0.0
    %2599 = vmatpush1.msra.mxu0 0.0
    %2600 = vmatprep.subr.mxu0 0.0
    %2601 = vmatpush1.msra.mxu0 0.0
    %2602 = vmatprep.subr.mxu0 0.0
    %2603 = vmatpush1.msra.mxu0 0.0
    %2604 = vmatprep.subr.mxu0 0.0
    %2605 = vmatpush1.msra.mxu0 0.0
    %2606 = vmatprep.subr.mxu0 0.0
    %2607 = vmatpush1.msra.mxu0 0.0
    %2608 = vmatprep.subr.mxu0 0.0
    %2609 = vmatpush1.msra.mxu0 0.0
    %2610 = vmatprep.subr.mxu0 0.0
    %2611 = vmatpush1.msra.mxu0 0.0
    %2612 = vmatprep.subr.mxu0 0.0
    %2613 = vmatpush1.msra.mxu0 0.0
    %2614 = vmatprep.subr.mxu0 0.0
    %2615 = vmatpush1.msra.mxu0 0.0
    %2616 = vmatprep.subr.mxu0 0.0
    %2617 = vmatpush1.msra.mxu0 0.0
    %2618 = vmatprep.subr.mxu0 0.0
    %2619 = vmatpush1.msra.mxu0 0.0
    %2620 = vmatprep.subr.mxu0 0.0
    %2621 = vmatpush1.msra.mxu0 0.0
    %2622 = vmatprep.subr.mxu0 0.0
    %2623 = vmatpush1.msra.mxu0 0.0
    %2624 = vmatprep.subr.mxu0 0.0
    %2625 = vmatpush1.msra.mxu0 0.0
    %2626 = vmatprep.subr.mxu0 0.0
    %2627 = vmatpush1.msra.mxu0 0.0
    %2628 = vmatprep.subr.mxu0 0.0
    %2629 = vmatpush1.msra.mxu0 0.0
    %2630 = vmatprep.subr.mxu0 0.0
    %2631 = vmatpush1.msra.mxu0 0.0
    %2632 = vmatprep.mubr.f32.mxu0 0.0
    %v2633 = vand.u32 %v2261, 4294901760
    %v2634 = vsub.f32 %v2261, %v2633
    %v2635 = vand.u32 %v2634, 4294901760
    %2636 = vmatmul.mubr.f32.gmra.mrb[0].mxu0 %v2635
    %v2637 = vpop.f32.mrb[0].mxu0
    %v2638 = vadd.f32 %v2543, %v2637
    %v2639 = vpop.f32.mrb[0].mxu0
    %2640 = vmatprep.mubr.f32.mxu0 0.0
    %v2641 = vand.u32 %v2264, 4294901760
    %v2642 = vsub.f32 %v2264, %v2641
    %v2643 = vand.u32 %v2642, 4294901760
    %2644 = vmatmul.mubr.f32.gmra.mrb[0].mxu0 %v2643
    %v2645 = vpop.f32.mrb[0].mxu0
    %v2646 = vadd.f32 %v2550, %v2645
    %v2647 = vpop.f32.mrb[0].mxu0
    %2648 = vmatprep.mubr.f32.mxu0 0.0
    %v2649 = vand.u32 %v2267, 4294901760
    %v2650 = vsub.f32 %v2267, %v2649
    %v2651 = vand.u32 %v2650, 4294901760
    %2652 = vmatmul.mubr.f32.gmra.mrb[0].mxu0 %v2651
    %v2653 = vpop.f32.mrb[0].mxu0
    %v2654 = vadd.f32 %v2557, %v2653
    %v2655 = vpop.f32.mrb[0].mxu0
    %2656 = vmatprep.mubr.f32.mxu0 0.0
    %v2657 = vand.u32 %v2270, 4294901760
    %v2658 = vsub.f32 %v2270, %v2657
    %v2659 = vand.u32 %v2658, 4294901760
    %2660 = vmatmul.mubr.f32.gmra.mrb[0].mxu0 %v2659
    %v2661 = vpop.f32.mrb[0].mxu0
    %v2662 = vadd.f32 %v2564, %v2661
    %v2663 = vpop.f32.mrb[0].mxu0
    %2664 = vdwg.mxu0
    %2665 = vmatprep.subr.mxu0 0.0
    %v2666 = vand.u32 %v893, 4294901760
    %v2667 = vsub.f32 %v893, %v2666
    %v2668 = vand.u32 %v2667, 4294901760
    %2669 = vmatpush1.msra.mxu0 %v2668
    %2670 = vmatprep.subr.mxu0 0.0
    %2671 = vmatpush1.msra.mxu0 0.0
    %2672 = vmatprep.subr.mxu0 0.0
    %2673 = vmatpush1.msra.mxu0 0.0
    %2674 = vmatprep.subr.mxu0 0.0
    %2675 = vmatpush1.msra.mxu0 0.0
    %2676 = vmatprep.subr.mxu0 0.0
    %2677 = vmatpush1.msra.mxu0 0.0
    %2678 = vmatprep.subr.mxu0 0.0
    %2679 = vmatpush1.msra.mxu0 0.0
    %2680 = vmatprep.subr.mxu0 0.0
    %2681 = vmatpush1.msra.mxu0 0.0
    %2682 = vmatprep.subr.mxu0 0.0
    %2683 = vmatpush1.msra.mxu0 0.0
    %2684 = vmatprep.subr.mxu0 0.0
    %2685 = vmatpush1.msra.mxu0 0.0
    %2686 = vmatprep.subr.mxu0 0.0
    %2687 = vmatpush1.msra.mxu0 0.0
    %2688 = vmatprep.subr.mxu0 0.0
    %2689 = vmatpush1.msra.mxu0 0.0
    %2690 = vmatprep.subr.mxu0 0.0
    %2691 = vmatpush1.msra.mxu0 0.0
    %2692 = vmatprep.subr.mxu0 0.0
    %2693 = vmatpush1.msra.mxu0 0.0
    %2694 = vmatprep.subr.mxu0 0.0
    %2695 = vmatpush1.msra.mxu0 0.0
    %2696 = vmatprep.subr.mxu0 0.0
    %2697 = vmatpush1.msra.mxu0 0.0
    %2698 = vmatprep.subr.mxu0 0.0
    %2699 = vmatpush1.msra.mxu0 0.0
    %2700 = vmatprep.subr.mxu0 0.0
    %2701 = vmatpush1.msra.mxu0 0.0
    %2702 = vmatprep.subr.mxu0 0.0
    %2703 = vmatpush1.msra.mxu0 0.0
    %2704 = vmatprep.subr.mxu0 0.0
    %2705 = vmatpush1.msra.mxu0 0.0
    %2706 = vmatprep.subr.mxu0 0.0
    %2707 = vmatpush1.msra.mxu0 0.0
    %2708 = vmatprep.subr.mxu0 0.0
    %2709 = vmatpush1.msra.mxu0 0.0
    %2710 = vmatprep.subr.mxu0 0.0
    %2711 = vmatpush1.msra.mxu0 0.0
    %2712 = vmatprep.subr.mxu0 0.0
    %2713 = vmatpush1.msra.mxu0 0.0
    %2714 = vmatprep.subr.mxu0 0.0
    %2715 = vmatpush1.msra.mxu0 0.0
    %2716 = vmatprep.subr.mxu0 0.0
    %2717 = vmatpush1.msra.mxu0 0.0
    %2718 = vmatprep.subr.mxu0 0.0
    %2719 = vmatpush1.msra.mxu0 0.0
    %2720 = vmatprep.subr.mxu0 0.0
    %2721 = vmatpush1.msra.mxu0 0.0
    %2722 = vmatprep.subr.mxu0 0.0
    %2723 = vmatpush1.msra.mxu0 0.0
    %2724 = vmatprep.subr.mxu0 0.0
    %2725 = vmatpush1.msra.mxu0 0.0
    %2726 = vmatprep.subr.mxu0 0.0
    %2727 = vmatpush1.msra.mxu0 0.0
    %2728 = vmatprep.subr.mxu0 0.0
    %2729 = vmatpush1.msra.mxu0 0.0
    %2730 = vmatprep.subr.mxu0 0.0
    %2731 = vmatpush1.msra.mxu0 0.0
    %2732 = vmatprep.mubr.f32.mxu0 0.0
    %v2733 = vand.u32 %v2261, 4294901760
    %2734 = vmatmul.mubr.f32.gmra.mrb[0].mxu0 %v2733
    %v2735 = vpop.f32.mrb[0].mxu0
    %v2736 = vadd.f32 %v2638, %v2735
    %v2737 = vpop.f32.mrb[0].mxu0
    %2738 = vmatprep.mubr.f32.mxu0 0.0
    %v2739 = vand.u32 %v2264, 4294901760
    %2740 = vmatmul.mubr.f32.gmra.mrb[0].mxu0 %v2739
    %v2741 = vpop.f32.mrb[0].mxu0
    %v2742 = vadd.f32 %v2646, %v2741
    %v2743 = vpop.f32.mrb[0].mxu0
    %2744 = vmatprep.mubr.f32.mxu0 0.0
    %v2745 = vand.u32 %v2267, 4294901760
    %2746 = vmatmul.mubr.f32.gmra.mrb[0].mxu0 %v2745
    %v2747 = vpop.f32.mrb[0].mxu0
    %v2748 = vadd.f32 %v2654, %v2747
    %v2749 = vpop.f32.mrb[0].mxu0
    %2750 = vmatprep.mubr.f32.mxu0 0.0
    %v2751 = vand.u32 %v2270, 4294901760
    %2752 = vmatmul.mubr.f32.gmra.mrb[0].mxu0 %v2751
    %v2753 = vpop.f32.mrb[0].mxu0
    %v2754 = vadd.f32 %v2662, %v2753
    %v2755 = vpop.f32.mrb[0].mxu0
    %2756 = vdwg.mxu0
    %2757 = vmatprep.subr.mxu0 0.0
    %v2758 = vand.u32 %v893, 4294901760
    %2759 = vmatpush1.msra.mxu0 %v2758
    %2760 = vmatprep.subr.mxu0 0.0
    %2761 = vmatpush1.msra.mxu0 0.0
    %2762 = vmatprep.subr.mxu0 0.0
    %2763 = vmatpush1.msra.mxu0 0.0
    %2764 = vmatprep.subr.mxu0 0.0
    %2765 = vmatpush1.msra.mxu0 0.0
    %2766 = vmatprep.subr.mxu0 0.0
    %2767 = vmatpush1.msra.mxu0 0.0
    %2768 = vmatprep.subr.mxu0 0.0
    %2769 = vmatpush1.msra.mxu0 0.0
    %2770 = vmatprep.subr.mxu0 0.0
    %2771 = vmatpush1.msra.mxu0 0.0
    %2772 = vmatprep.subr.mxu0 0.0
    %2773 = vmatpush1.msra.mxu0 0.0
    %2774 = vmatprep.subr.mxu0 0.0
    %2775 = vmatpush1.msra.mxu0 0.0
    %2776 = vmatprep.subr.mxu0 0.0
    %2777 = vmatpush1.msra.mxu0 0.0
    %2778 = vmatprep.subr.mxu0 0.0
    %2779 = vmatpush1.msra.mxu0 0.0
    %2780 = vmatprep.subr.mxu0 0.0
    %2781 = vmatpush1.msra.mxu0 0.0
    %2782 = vmatprep.subr.mxu0 0.0
    %2783 = vmatpush1.msra.mxu0 0.0
    %2784 = vmatprep.subr.mxu0 0.0
    %2785 = vmatpush1.msra.mxu0 0.0
    %2786 = vmatprep.subr.mxu0 0.0
    %2787 = vmatpush1.msra.mxu0 0.0
    %2788 = vmatprep.subr.mxu0 0.0
    %2789 = vmatpush1.msra.mxu0 0.0
    %2790 = vmatprep.subr.mxu0 0.0
    %2791 = vmatpush1.msra.mxu0 0.0
    %2792 = vmatprep.subr.mxu0 0.0
    %2793 = vmatpush1.msra.mxu0 0.0
    %2794 = vmatprep.subr.mxu0 0.0
    %2795 = vmatpush1.msra.mxu0 0.0
    %2796 = vmatprep.subr.mxu0 0.0
    %2797 = vmatpush1.msra.mxu0 0.0
    %2798 = vmatprep.subr.mxu0 0.0
    %2799 = vmatpush1.msra.mxu0 0.0
    %2800 = vmatprep.subr.mxu0 0.0
    %2801 = vmatpush1.msra.mxu0 0.0
    %2802 = vmatprep.subr.mxu0 0.0
    %2803 = vmatpush1.msra.mxu0 0.0
    %2804 = vmatprep.subr.mxu0 0.0
    %2805 = vmatpush1.msra.mxu0 0.0
    %2806 = vmatprep.subr.mxu0 0.0
    %2807 = vmatpush1.msra.mxu0 0.0
    %2808 = vmatprep.subr.mxu0 0.0
    %2809 = vmatpush1.msra.mxu0 0.0
    %2810 = vmatprep.subr.mxu0 0.0
    %2811 = vmatpush1.msra.mxu0 0.0
    %2812 = vmatprep.subr.mxu0 0.0
    %2813 = vmatpush1.msra.mxu0 0.0
    %2814 = vmatprep.subr.mxu0 0.0
    %2815 = vmatpush1.msra.mxu0 0.0
    %2816 = vmatprep.subr.mxu0 0.0
    %2817 = vmatpush1.msra.mxu0 0.0
    %2818 = vmatprep.subr.mxu0 0.0
    %2819 = vmatpush1.msra.mxu0 0.0
    %2820 = vmatprep.subr.mxu0 0.0
    %2821 = vmatpush1.msra.mxu0 0.0
    %2822 = vmatprep.mubr.f32.mxu0 0.0
    %v2823 = vand.u32 %v2261, 4294901760
    %2824 = vmatmul.mubr.f32.gmra.mrb[0].mxu0 %v2823
    %v2825 = vpop.f32.mrb[0].mxu0
    %v2826 = vadd.f32 %v2736, %v2825
    %v2827 = vpop.f32.mrb[0].mxu0
    %2828 = vmatprep.mubr.f32.mxu0 0.0
    %v2829 = vand.u32 %v2264, 4294901760
    %2830 = vmatmul.mubr.f32.gmra.mrb[0].mxu0 %v2829
    %v2831 = vpop.f32.mrb[0].mxu0
    %v2832 = vadd.f32 %v2742, %v2831
    %v2833 = vpop.f32.mrb[0].mxu0
    %2834 = vmatprep.mubr.f32.mxu0 0.0
    %v2835 = vand.u32 %v2267, 4294901760
    %2836 = vmatmul.mubr.f32.gmra.mrb[0].mxu0 %v2835
    %v2837 = vpop.f32.mrb[0].mxu0
    %v2838 = vadd.f32 %v2748, %v2837
    %v2839 = vpop.f32.mrb[0].mxu0
    %2840 = vmatprep.mubr.f32.mxu0 0.0
    %v2841 = vand.u32 %v2270, 4294901760
    %2842 = vmatmul.mubr.f32.gmra.mrb[0].mxu0 %v2841
    %v2843 = vpop.f32.mrb[0].mxu0
    %v2844 = vadd.f32 %v2754, %v2843
    %v2845 = vpop.f32.mrb[0].mxu0
    %2846 = vdwg.mxu0
    %v2847 = vld [vmem:[#allocation5] sm:$0x1]
    %v2848 = vld [vmem:[#allocation7] sm:$0x1]
    %v2849 = vmul.f32 %v1470, %v2826
    %v2850 = vmul.f32 %v1471, %v2832
    %v2851 = vmul.f32 %v1472, %v2838
    %v2852 = vmul.f32 %v1473, %v2844
    %v2854 = vlaneseq
    %v2855 = vshrl.u32 %v2854, 7
    %v2856 = vsub.s32 0, %v2855
    %v2857 = vrot.slane %v2847, %v2856
    %v2859 = vmul.f32 %v2849, %v2857
    %v2860 = vmul.f32 %v2850, %v2857
    %v2861 = vmul.f32 %v2851, %v2857
    %v2862 = vmul.f32 %v2852, %v2857
    %v2864 = vlaneseq
    %v2865 = vshrl.u32 %v2864, 7
    %v2866 = vsub.s32 0, %v2865
    %v2867 = vrot.slane %v2848, %v2866
    %v2869 = vadd.f32 %v2859, %v2867
    %v2870 = vadd.f32 %v2860, %v2867
    %v2871 = vadd.f32 %v2861, %v2867
    %v2872 = vadd.f32 %v2862, %v2867
    %2873 = vst [vmem:[#allocation11] sm:$0xff] %v2869
    %2874 = vst [vmem:[#allocation11 + $0x8] sm:$0xff] %v2870
    %2875 = vst [vmem:[#allocation11 + $0x10] sm:$0xff] %v2871
    %2876 = vst [vmem:[#allocation11 + $0x18] sm:$0xff] %v2872
    // Predicated region
    $region42: #{tpu_custom_call.1} parent=1 // pred_check
      _
    $region43: #{tpu_custom_call.1} parent=1 // pred_check_branch
      %2878 = sbr.rel (0) target = $region45
    $region44: #{tpu_custom_call.1} parent=1 // pred_region
      %s2880 = ssub.s32 512, 512
      %2881 = vsyncadd [#allocation4], %s2880
      %s2882 = sshll.u32 [#allocation11], 4
      %s2883 = int_to_ptr.vmem [resolvable:$true] %s2882
      %2888 = dma.vmem_to_hbm [thread:$0]  %s2883, 512, %s5, [#allocation4], 128, 128, 8
    $region45: #{tpu_custom_call.1} parent=1 // pred_fallthru
      _
    // Predicated region
    $region46: #{tpu_custom_call.1} parent=1 // pred_check
      _
    $region47: #{tpu_custom_call.1} parent=1 // pred_check_branch
      %2890 = sbr.rel (0) target = $region49
    $region48: #{tpu_custom_call.1} parent=1 // pred_region
      %2891 = dma.done [#allocation4], 512
    $region49: #{tpu_custom_call.1} parent=1 // pred_fallthru
      _
    %2892 = vsyncpa [#allocation3], 1
    %2893 = vsyncpa [#allocation6], 1
    %2894 = vsyncpa [#allocation9], 1
    %2895 = vsyncpa [#allocation4], 1

</llo_original>
